<compile_context>
chip_gen: v5e
topology: v5e:2x2
jax: 0.10.0
libtpu: 0.0.40
codegen_flags: <defaults>
</compile_context>

<pallas_src>
import functools
import numpy as np
import jax
import jax.numpy as jnp
from jax.experimental import pallas as pl
from jax.experimental.pallas import tpu as pltpu


def _mha_flash_kernel(q_ref, k_ref, v_ref,
                      wq_ref, wk_ref, wv_ref, wfc_ref,
                      gamma_ref, beta_ref,
                      out_ref,
                      q_s, k_s, v_s, m_s, l_s, acc_s,
                      *, n_head, d_k, d_v, eps):
    ki = pl.program_id(2)
    nk = pl.num_programs(2)
    inv_temp = 1.0 / (float(d_k) ** 0.5)

    @pl.when(ki == 0)
    def _init():
        # Fresh accumulators for this (batch, q-tile); project the Q tile once.
        m_s[...] = jnp.full_like(m_s, -jnp.inf)
        l_s[...] = jnp.zeros_like(l_s)
        acc_s[...] = jnp.zeros_like(acc_s)
        q_tile = q_ref[0]                                      # (tq, D), native dtype
        for h in range(n_head):                                # static loop; immediate
            qh = jnp.dot(q_tile, wq_ref[h],                    # stores bound live ranges
                         preferred_element_type=jnp.float32) * inv_temp
            q_s[h] = qh.astype(q_s.dtype)

    # Project this K/V tile per head (recomputed per q-tile: the price of fusing
    # the projections into the attention kernel; HBM traffic stays O(B*L*D)).
    k_tile = k_ref[0]                                          # (tk, D)
    v_tile = v_ref[0]                                          # (tk, D)
    for h in range(n_head):
        k_s[h] = jnp.dot(k_tile, wk_ref[h],
                         preferred_element_type=jnp.float32).astype(k_s.dtype)
        v_s[h] = jnp.dot(v_tile, wv_ref[h],
                         preferred_element_type=jnp.float32).astype(v_s.dtype)

    # Head-batched scores: (H, tq, dk) x (H, tk, dk) -> (H, tq, tk), f32 acc.
    s = jnp.einsum("htd,hsd->hts", q_s[...], k_s[...],
                   preferred_element_type=jnp.float32)

    # Online softmax update.
    m_prev = m_s[...]                                          # (H, tq, 1)
    m_new = jnp.maximum(m_prev, jnp.max(s, axis=-1, keepdims=True))
    alpha = jnp.exp(m_prev - m_new)
    p = jnp.exp(s - m_new)                                     # (H, tq, tk)
    l_s[...] = alpha * l_s[...] + jnp.sum(p, axis=-1, keepdims=True)
    pv = jnp.einsum("hts,hsd->htd", p.astype(v_s.dtype), v_s[...],
                    preferred_element_type=jnp.float32)        # (H, tq, dv)
    acc_s[...] = alpha * acc_s[...] + pv
    m_s[...] = m_new

    @pl.when(ki == nk - 1)
    def _finalize():
        # Softmax normalization: approx reciprocal (EUP slot) on the tiny
        # (H, tq, 1) denominator, + one Newton step to recover f32 accuracy.
        l = l_s[...]
        linv = pl.reciprocal(l, approx=True)
        linv = linv * (2.0 - l * linv)

        # Output projection accumulated per head: sum_h (acc_h / l_h) @ wfc_h.
        proj = None
        for h in range(n_head):
            o_h = (acc_s[h] * linv[h]).astype(q_ref.dtype)     # (tq, dv)
            contrib = jnp.dot(o_h, wfc_ref[h],
                              preferred_element_type=jnp.float32)
            proj = contrib if proj is None else proj + contrib  # (tq, D) f32

        # Residual + LayerNorm(d_model, eps) in f32.
        x = proj + q_ref[0].astype(jnp.float32)
        mean = jnp.mean(x, axis=-1, keepdims=True)
        var = jnp.mean(jnp.square(x - mean), axis=-1, keepdims=True)
        y = (x - mean) * jax.lax.rsqrt(var + eps)
        y = y * gamma_ref[...].astype(jnp.float32) + beta_ref[...].astype(jnp.float32)
        out_ref[0] = y.astype(out_ref.dtype)


def _default_blocks(Lq, Lk):
    """Pick Lq/Lk tile sizes from available VMEM (bigger on v5e/v6e, smaller on v7x)."""
    try:
        vmem = pltpu.get_tpu_info().vmem_capacity_bytes
    except Exception:
        vmem = 64 * 1024 * 1024
    big = vmem >= 96 * 1024 * 1024          # v5e/v6e: 128 MiB; v7x: 64 MiB
    bq = 512 if big else 256
    bk = 512 if big else 256
    return min(bq, Lq), min(bk, Lk)


def multi_head_attention(q, k, v, params, *, n_head, d_k, d_v, eps=1e-6,
                         block_q=None, block_k=None):
    """q,k,v: (B, L, d_model). Returns out (B, Lq, d_model).

    The attention-probability tensor is intentionally not returned (CleanUNet
    discards it)."""
    B, Lq, D = q.shape
    Lk = k.shape[1]
    assert v.shape[1] == Lk
    assert k.shape[-1] == D and v.shape[-1] == D

    dbq, dbk = _default_blocks(Lq, Lk)
    block_q = dbq if block_q is None else min(block_q, Lq)
    block_k = dbk if block_k is None else min(block_k, Lk)
    # TODO(synk): pad ragged sequence lengths; here we require exact tiling.
    assert Lq % block_q == 0 and Lk % block_k == 0

    # Pre-split the projection weights per head once, outside the kernel, so no
    # lane-dim slicing at d_k offsets happens inside the hot loop.
    wq3 = params["wq"].reshape(D, n_head, d_k).transpose(1, 0, 2)   # (H, D, dk)
    wk3 = params["wk"].reshape(D, n_head, d_k).transpose(1, 0, 2)   # (H, D, dk)
    wv3 = params["wv"].reshape(D, n_head, d_v).transpose(1, 0, 2)   # (H, D, dv)
    wfc3 = params["wfc"].reshape(n_head, d_v, D)                    # (H, dv, D)
    gamma = params["gamma"].reshape(1, D)
    beta = params["beta"].reshape(1, D)

    grid = (B, Lq // block_q, Lk // block_k)
    kernel = functools.partial(_mha_flash_kernel, n_head=n_head,
                               d_k=d_k, d_v=d_v, eps=eps)

    grid_spec = pltpu.PrefetchScalarGridSpec(
        num_scalar_prefetch=0,
        grid=grid,
        in_specs=[
            pl.BlockSpec((1, block_q, D), lambda b, qi, ki: (b, qi, 0)),
            pl.BlockSpec((1, block_k, D), lambda b, qi, ki: (b, ki, 0)),
            pl.BlockSpec((1, block_k, D), lambda b, qi, ki: (b, ki, 0)),
            # Constant-index weight blocks. NOTE: on v7x (64 MiB VMEM) consider
            # pipeline_mode=pl.Buffered(1) here to reclaim the second buffer.
            pl.BlockSpec((n_head, D, d_k), lambda b, qi, ki: (0, 0, 0)),
            pl.BlockSpec((n_head, D, d_k), lambda b, qi, ki: (0, 0, 0)),
            pl.BlockSpec((n_head, D, d_v), lambda b, qi, ki: (0, 0, 0)),
            pl.BlockSpec((n_head, d_v, D), lambda b, qi, ki: (0, 0, 0)),
            pl.BlockSpec((1, D), lambda b, qi, ki: (0, 0)),
            pl.BlockSpec((1, D), lambda b, qi, ki: (0, 0)),
        ],
        out_specs=pl.BlockSpec((1, block_q, D), lambda b, qi, ki: (b, qi, 0)),
        scratch_shapes=[
            pltpu.VMEM((n_head, block_q, d_k), q.dtype),      # projected Q tile
            pltpu.VMEM((n_head, block_k, d_k), q.dtype),      # projected K tile
            pltpu.VMEM((n_head, block_k, d_v), q.dtype),      # projected V tile
            pltpu.VMEM((n_head, block_q, 1), jnp.float32),    # running max
            pltpu.VMEM((n_head, block_q, 1), jnp.float32),    # running denom
            pltpu.VMEM((n_head, block_q, d_v), jnp.float32),  # output accumulator
        ],
    )

    return pl.pallas_call(
        kernel,
        out_shape=jax.ShapeDtypeStruct((B, Lq, D), q.dtype),
        grid_spec=grid_spec,
        compiler_params=pltpu.CompilerParams(
            # batch and q-tile axes are independent (megacore-parallel); the
            # k-tile axis carries the online-softmax accumulator.
            dimension_semantics=("parallel", "parallel", "arbitrary"),
            vmem_limit_bytes=64 * 1024 * 1024,
        ),
    )(q, k, v, wq3, wk3, wv3, wfc3, gamma, beta)


def _reference(q, k, v, params, *, n_head, d_k, d_v, eps=1e-6):
    """Pure-JAX reference mirroring the PyTorch forward (eval mode, no mask)."""
    B, Lq, D = q.shape
    Lk = k.shape[1]
    Q = (q @ params["wq"]).reshape(B, Lq, n_head, d_k).transpose(0, 2, 1, 3)
    K = (k @ params["wk"]).reshape(B, Lk, n_head, d_k).transpose(0, 2, 1, 3)
    V = (v @ params["wv"]).reshape(B, Lk, n_head, d_v).transpose(0, 2, 1, 3)
    scores = jnp.einsum("bhqd,bhkd->bhqk", Q / (d_k ** 0.5), K)
    attn = jax.nn.softmax(scores, axis=-1)
    out = jnp.einsum("bhqk,bhkd->bhqd", attn, V)
    out = out.transpose(0, 2, 1, 3).reshape(B, Lq, n_head * d_v)
    out = out @ params["wfc"] + q
    mean = jnp.mean(out, axis=-1, keepdims=True)
    var = jnp.mean((out - mean) ** 2, axis=-1, keepdims=True)
    out = (out - mean) / jnp.sqrt(var + eps)
    out = out * params["gamma"].reshape(1, 1, D) + params["beta"].reshape(1, 1, D)
    return out


if __name__ == "__main__":
    # Small shapes consistent with the module (d_model = n_head * d_k).
    B, L, d_model = 2, 32, 32
    n_head, d_k, d_v = 2, 16, 16

    key = jax.random.PRNGKey(0)
    kq, kk, kv, k1, k2, k3, k4 = jax.random.split(key, 7)

    q = jax.random.normal(kq, (B, L, d_model), dtype=jnp.float32)
    k = jax.random.normal(kk, (B, L, d_model), dtype=jnp.float32)
    v = jax.random.normal(kv, (B, L, d_model), dtype=jnp.float32)

    scale = 1.0 / np.sqrt(d_model)
    params = {
        "wq": jax.random.normal(k1, (d_model, n_head * d_k), jnp.float32) * scale,
        "wk": jax.random.normal(k2, (d_model, n_head * d_k), jnp.float32) * scale,
        "wv": jax.random.normal(k3, (d_model, n_head * d_v), jnp.float32) * scale,
        "wfc": jax.random.normal(k4, (n_head * d_v, d_model), jnp.float32)
               * (1.0 / np.sqrt(n_head * d_v)),
        "gamma": jnp.ones((d_model,), jnp.float32),   # LayerNorm default weight
        "beta": jnp.zeros((d_model,), jnp.float32),   # LayerNorm default bias
    }

    ref = _reference(q, k, v, params, n_head=n_head, d_k=d_k, d_v=d_v)

    # Tiled path: 2 q-tiles x 2 k-tiles per batch (exercises the online softmax).
    out = multi_head_attention(q, k, v, params, n_head=n_head, d_k=d_k, d_v=d_v,
                               block_q=16, block_k=16)
    out = jax.block_until_ready(out)
    np.testing.assert_allclose(np.asarray(out), np.asarray(ref), rtol=5e-5, atol=5e-5)

    # Default (full-sequence block) path.
    out_full = multi_head_attention(q, k, v, params,
                                    n_head=n_head, d_k=d_k, d_v=d_v)
    out_full = jax.block_until_ready(out_full)
    np.testing.assert_allclose(np.asarray(out_full), np.asarray(ref),
                               rtol=5e-5, atol=5e-5)

    print("KERNEL_OK")
</pallas_src>

<mosaic_0001>
module attributes {stable_mosaic.version = 11 : i64} {
  func.func @_mha_flash_kernel(%arg0: i32, %arg1: i32, %arg2: i32, %arg3: memref<1x16x32xf32, #tpu.memory_space<vmem>>, %arg4: memref<1x16x32xf32, #tpu.memory_space<vmem>>, %arg5: memref<1x16x32xf32, #tpu.memory_space<vmem>>, %arg6: memref<2x32x16xf32, #tpu.memory_space<vmem>>, %arg7: memref<2x32x16xf32, #tpu.memory_space<vmem>>, %arg8: memref<2x32x16xf32, #tpu.memory_space<vmem>>, %arg9: memref<2x16x32xf32, #tpu.memory_space<vmem>>, %arg10: memref<1x32xf32, #tpu.memory_space<vmem>>, %arg11: memref<1x32xf32, #tpu.memory_space<vmem>>, %arg12: memref<1x16x32xf32, #tpu.memory_space<vmem>>, %arg13: memref<2x16x16xf32, #tpu.memory_space<vmem>>, %arg14: memref<2x16x16xf32, #tpu.memory_space<vmem>>, %arg15: memref<2x16x16xf32, #tpu.memory_space<vmem>>, %arg16: memref<2x16x1xf32, #tpu.memory_space<vmem>>, %arg17: memref<2x16x1xf32, #tpu.memory_space<vmem>>, %arg18: memref<2x16x16xf32, #tpu.memory_space<vmem>>) attributes {dimension_semantics = [#tpu.dimension_semantics<parallel>, #tpu.dimension_semantics<parallel>, #tpu.dimension_semantics<arbitrary>], iteration_bounds = array<i64: 2, 2, 2>, scalar_prefetch = 0 : i64, scratch_operands = 6 : i64, tpu.core_type = #tpu.core_type<tc>, window_params = [{transform_indices = @transform_0, window_bounds = array<i64: 1, 16, 32>}, {transform_indices = @transform_1, window_bounds = array<i64: 1, 16, 32>}, {transform_indices = @transform_2, window_bounds = array<i64: 1, 16, 32>}, {pipeline_mode = #tpu.pipeline_mode<synchronous>, transform_indices = @transform_3, window_bounds = array<i64: 2, 32, 16>}, {pipeline_mode = #tpu.pipeline_mode<synchronous>, transform_indices = @transform_4, window_bounds = array<i64: 2, 32, 16>}, {pipeline_mode = #tpu.pipeline_mode<synchronous>, transform_indices = @transform_5, window_bounds = array<i64: 2, 32, 16>}, {pipeline_mode = #tpu.pipeline_mode<synchronous>, transform_indices = @transform_6, window_bounds = array<i64: 2, 16, 32>}, {pipeline_mode = #tpu.pipeline_mode<synchronous>, transform_indices = @transform_7, window_bounds = array<i64: 1, 32>}, {pipeline_mode = #tpu.pipeline_mode<synchronous>, transform_indices = @transform_8, window_bounds = array<i64: 1, 32>}, {transform_indices = @transform_9, window_bounds = array<i64: 1, 16, 32>}]} {
    %c0_i32 = arith.constant 0 : i32
    %0 = arith.cmpi eq, %arg2, %c0_i32 : i32
    %1 = arith.extui %0 : i1 to i32
    %c0_i32_0 = arith.constant 0 : i32
    %2 = arith.cmpi ne, %1, %c0_i32_0 : i32
    scf.if %2 {
      %cst_64 = arith.constant 0xFF800000 : f32
      %60 = vector.broadcast %cst_64 : f32 to vector<2x16x1xf32>
      %c0_65 = arith.constant 0 : index
      %c0_66 = arith.constant 0 : index
      %c0_67 = arith.constant 0 : index
      %61 = vector.load %arg16[%c0_65, %c0_66, %c0_67] : memref<2x16x1xf32, #tpu.memory_space<vmem>>, vector<2x16x1xf32>
      tpu.vector_store %arg16[%c0_65, %c0_66, %c0_67], %60 {strides = array<i32>} : memref<2x16x1xf32, #tpu.memory_space<vmem>>, vector<2x16x1xf32>,
      %cst_68 = arith.constant 0.000000e+00 : f32
      %62 = vector.broadcast %cst_68 : f32 to vector<2x16x1xf32>
      %c0_69 = arith.constant 0 : index
      %c0_70 = arith.constant 0 : index
      %c0_71 = arith.constant 0 : index
      %63 = vector.load %arg17[%c0_69, %c0_70, %c0_71] : memref<2x16x1xf32, #tpu.memory_space<vmem>>, vector<2x16x1xf32>
      tpu.vector_store %arg17[%c0_69, %c0_70, %c0_71], %62 {strides = array<i32>} : memref<2x16x1xf32, #tpu.memory_space<vmem>>, vector<2x16x1xf32>,
      %cst_72 = arith.constant 0.000000e+00 : f32
      %64 = vector.broadcast %cst_72 : f32 to vector<2x16x16xf32>
      %c0_73 = arith.constant 0 : index
      %c0_74 = arith.constant 0 : index
      %c0_75 = arith.constant 0 : index
      %65 = vector.load %arg18[%c0_73, %c0_74, %c0_75] : memref<2x16x16xf32, #tpu.memory_space<vmem>>, vector<2x16x16xf32>
      tpu.vector_store %arg18[%c0_73, %c0_74, %c0_75], %64 {strides = array<i32>} : memref<2x16x16xf32, #tpu.memory_space<vmem>>, vector<2x16x16xf32>,
      %c0_76 = arith.constant 0 : index
      %c0_77 = arith.constant 0 : index
      %c0_78 = arith.constant 0 : index
      %66 = vector.load %arg3[%c0_76, %c0_77, %c0_78] : memref<1x16x32xf32, #tpu.memory_space<vmem>>, vector<1x16x32xf32>
      %67 = vector.shape_cast %66 : vector<1x16x32xf32> to vector<16x32xf32>
      %c0_79 = arith.constant 0 : index
      %c0_80 = arith.constant 0 : index
      %c0_81 = arith.constant 0 : index
      %68 = vector.load %arg6[%c0_79, %c0_80, %c0_81] : memref<2x32x16xf32, #tpu.memory_space<vmem>>, vector<1x32x16xf32>
      %69 = vector.shape_cast %68 : vector<1x32x16xf32> to vector<32x16xf32>
      %cst_82 = arith.constant dense<0.000000e+00> : vector<16x16xf32>
      %70 = tpu.matmul %67, %69, %cst_82 {dimension_numbers = #tpu.dot_dimension_numbers<[1], [0], [0], [1], [0, 0, 1, 1], [], []>} : vector<16x32xf32>, vector<32x16xf32>, vector<16x16xf32> -> vector<16x16xf32>
      %cst_83 = arith.constant 2.500000e-01 : f32
      %71 = vector.broadcast %cst_83 : f32 to vector<16x16xf32>
      %72 = arith.mulf %70, %71 : vector<16x16xf32>
      %c0_84 = arith.constant 0 : index
      %c0_85 = arith.constant 0 : index
      %c0_86 = arith.constant 0 : index
      %73 = vector.load %arg13[%c0_84, %c0_85, %c0_86] : memref<2x16x16xf32, #tpu.memory_space<vmem>>, vector<1x16x16xf32>
      %74 = vector.shape_cast %73 : vector<1x16x16xf32> to vector<16x16xf32>
      %75 = vector.shape_cast %72 : vector<16x16xf32> to vector<1x16x16xf32>
      tpu.vector_store %arg13[%c0_84, %c0_85, %c0_86], %75 {strides = array<i32>} : memref<2x16x16xf32, #tpu.memory_space<vmem>>, vector<1x16x16xf32>,
      %c1_87 = arith.constant 1 : index
      %c0_88 = arith.constant 0 : index
      %c0_89 = arith.constant 0 : index
      %76 = vector.load %arg6[%c1_87, %c0_88, %c0_89] : memref<2x32x16xf32, #tpu.memory_space<vmem>>, vector<1x32x16xf32>
      %77 = vector.shape_cast %76 : vector<1x32x16xf32> to vector<32x16xf32>
      %cst_90 = arith.constant dense<0.000000e+00> : vector<16x16xf32>
      %78 = tpu.matmul %67, %77, %cst_90 {dimension_numbers = #tpu.dot_dimension_numbers<[1], [0], [0], [1], [0, 0, 1, 1], [], []>} : vector<16x32xf32>, vector<32x16xf32>, vector<16x16xf32> -> vector<16x16xf32>
      %cst_91 = arith.constant 2.500000e-01 : f32
      %79 = vector.broadcast %cst_91 : f32 to vector<16x16xf32>
      %80 = arith.mulf %78, %79 : vector<16x16xf32>
      %c1_92 = arith.constant 1 : index
      %c0_93 = arith.constant 0 : index
      %c0_94 = arith.constant 0 : index
      %81 = vector.load %arg13[%c1_92, %c0_93, %c0_94] : memref<2x16x16xf32, #tpu.memory_space<vmem>>, vector<1x16x16xf32>
      %82 = vector.shape_cast %81 : vector<1x16x16xf32> to vector<16x16xf32>
      %83 = vector.shape_cast %80 : vector<16x16xf32> to vector<1x16x16xf32>
      tpu.vector_store %arg13[%c1_92, %c0_93, %c0_94], %83 {strides = array<i32>} : memref<2x16x16xf32, #tpu.memory_space<vmem>>, vector<1x16x16xf32>,
    } else {
    }
    %c0 = arith.constant 0 : index
    %c0_1 = arith.constant 0 : index
    %c0_2 = arith.constant 0 : index
    %3 = vector.load %arg4[%c0, %c0_1, %c0_2] : memref<1x16x32xf32, #tpu.memory_space<vmem>>, vector<1x16x32xf32>
    %4 = vector.shape_cast %3 : vector<1x16x32xf32> to vector<16x32xf32>
    %c0_3 = arith.constant 0 : index
    %c0_4 = arith.constant 0 : index
    %c0_5 = arith.constant 0 : index
    %5 = vector.load %arg5[%c0_3, %c0_4, %c0_5] : memref<1x16x32xf32, #tpu.memory_space<vmem>>, vector<1x16x32xf32>
    %6 = vector.shape_cast %5 : vector<1x16x32xf32> to vector<16x32xf32>
    %c0_6 = arith.constant 0 : index
    %c0_7 = arith.constant 0 : index
    %c0_8 = arith.constant 0 : index
    %7 = vector.load %arg7[%c0_6, %c0_7, %c0_8] : memref<2x32x16xf32, #tpu.memory_space<vmem>>, vector<1x32x16xf32>
    %8 = vector.shape_cast %7 : vector<1x32x16xf32> to vector<32x16xf32>
    %cst = arith.constant dense<0.000000e+00> : vector<16x16xf32>
    %9 = tpu.matmul %4, %8, %cst {dimension_numbers = #tpu.dot_dimension_numbers<[1], [0], [0], [1], [0, 0, 1, 1], [], []>} : vector<16x32xf32>, vector<32x16xf32>, vector<16x16xf32> -> vector<16x16xf32>
    %c0_9 = arith.constant 0 : index
    %c0_10 = arith.constant 0 : index
    %c0_11 = arith.constant 0 : index
    %10 = vector.load %arg14[%c0_9, %c0_10, %c0_11] : memref<2x16x16xf32, #tpu.memory_space<vmem>>, vector<1x16x16xf32>
    %11 = vector.shape_cast %10 : vector<1x16x16xf32> to vector<16x16xf32>
    %12 = vector.shape_cast %9 : vector<16x16xf32> to vector<1x16x16xf32>
    tpu.vector_store %arg14[%c0_9, %c0_10, %c0_11], %12 {strides = array<i32>} : memref<2x16x16xf32, #tpu.memory_space<vmem>>, vector<1x16x16xf32>,
    %c0_12 = arith.constant 0 : index
    %c0_13 = arith.constant 0 : index
    %c0_14 = arith.constant 0 : index
    %13 = vector.load %arg8[%c0_12, %c0_13, %c0_14] : memref<2x32x16xf32, #tpu.memory_space<vmem>>, vector<1x32x16xf32>
    %14 = vector.shape_cast %13 : vector<1x32x16xf32> to vector<32x16xf32>
    %cst_15 = arith.constant dense<0.000000e+00> : vector<16x16xf32>
    %15 = tpu.matmul %6, %14, %cst_15 {dimension_numbers = #tpu.dot_dimension_numbers<[1], [0], [0], [1], [0, 0, 1, 1], [], []>} : vector<16x32xf32>, vector<32x16xf32>, vector<16x16xf32> -> vector<16x16xf32>
    %c0_16 = arith.constant 0 : index
    %c0_17 = arith.constant 0 : index
    %c0_18 = arith.constant 0 : index
    %16 = vector.load %arg15[%c0_16, %c0_17, %c0_18] : memref<2x16x16xf32, #tpu.memory_space<vmem>>, vector<1x16x16xf32>
    %17 = vector.shape_cast %16 : vector<1x16x16xf32> to vector<16x16xf32>
    %18 = vector.shape_cast %15 : vector<16x16xf32> to vector<1x16x16xf32>
    tpu.vector_store %arg15[%c0_16, %c0_17, %c0_18], %18 {strides = array<i32>} : memref<2x16x16xf32, #tpu.memory_space<vmem>>, vector<1x16x16xf32>,
    %c1 = arith.constant 1 : index
    %c0_19 = arith.constant 0 : index
    %c0_20 = arith.constant 0 : index
    %19 = vector.load %arg7[%c1, %c0_19, %c0_20] : memref<2x32x16xf32, #tpu.memory_space<vmem>>, vector<1x32x16xf32>
    %20 = vector.shape_cast %19 : vector<1x32x16xf32> to vector<32x16xf32>
    %cst_21 = arith.constant dense<0.000000e+00> : vector<16x16xf32>
    %21 = tpu.matmul %4, %20, %cst_21 {dimension_numbers = #tpu.dot_dimension_numbers<[1], [0], [0], [1], [0, 0, 1, 1], [], []>} : vector<16x32xf32>, vector<32x16xf32>, vector<16x16xf32> -> vector<16x16xf32>
    %c1_22 = arith.constant 1 : index
    %c0_23 = arith.constant 0 : index
    %c0_24 = arith.constant 0 : index
    %22 = vector.load %arg14[%c1_22, %c0_23, %c0_24] : memref<2x16x16xf32, #tpu.memory_space<vmem>>, vector<1x16x16xf32>
    %23 = vector.shape_cast %22 : vector<1x16x16xf32> to vector<16x16xf32>
    %24 = vector.shape_cast %21 : vector<16x16xf32> to vector<1x16x16xf32>
    tpu.vector_store %arg14[%c1_22, %c0_23, %c0_24], %24 {strides = array<i32>} : memref<2x16x16xf32, #tpu.memory_space<vmem>>, vector<1x16x16xf32>,
    %c1_25 = arith.constant 1 : index
    %c0_26 = arith.constant 0 : index
    %c0_27 = arith.constant 0 : index
    %25 = vector.load %arg8[%c1_25, %c0_26, %c0_27] : memref<2x32x16xf32, #tpu.memory_space<vmem>>, vector<1x32x16xf32>
    %26 = vector.shape_cast %25 : vector<1x32x16xf32> to vector<32x16xf32>
    %cst_28 = arith.constant dense<0.000000e+00> : vector<16x16xf32>
    %27 = tpu.matmul %6, %26, %cst_28 {dimension_numbers = #tpu.dot_dimension_numbers<[1], [0], [0], [1], [0, 0, 1, 1], [], []>} : vector<16x32xf32>, vector<32x16xf32>, vector<16x16xf32> -> vector<16x16xf32>
    %c1_29 = arith.constant 1 : index
    %c0_30 = arith.constant 0 : index
    %c0_31 = arith.constant 0 : index
    %28 = vector.load %arg15[%c1_29, %c0_30, %c0_31] : memref<2x16x16xf32, #tpu.memory_space<vmem>>, vector<1x16x16xf32>
    %29 = vector.shape_cast %28 : vector<1x16x16xf32> to vector<16x16xf32>
    %30 = vector.shape_cast %27 : vector<16x16xf32> to vector<1x16x16xf32>
    tpu.vector_store %arg15[%c1_29, %c0_30, %c0_31], %30 {strides = array<i32>} : memref<2x16x16xf32, #tpu.memory_space<vmem>>, vector<1x16x16xf32>,
    %c0_32 = arith.constant 0 : index
    %c0_33 = arith.constant 0 : index
    %c0_34 = arith.constant 0 : index
    %31 = vector.load %arg13[%c0_32, %c0_33, %c0_34] : memref<2x16x16xf32, #tpu.memory_space<vmem>>, vector<2x16x16xf32>
    %c0_35 = arith.constant 0 : index
    %c0_36 = arith.constant 0 : index
    %c0_37 = arith.constant 0 : index
    %32 = vector.load %arg14[%c0_35, %c0_36, %c0_37] : memref<2x16x16xf32, #tpu.memory_space<vmem>>, vector<2x16x16xf32>
    "tpu.trace_start"() <{level = 10 : i32, message = "htd,hsd->hts"}> : () -> ()
    %cst_38 = arith.constant dense<0.000000e+00> : vector<2x16x16xf32>
    %33 = tpu.matmul %31, %32, %cst_38 {dimension_numbers = #tpu.dot_dimension_numbers<[2], [2], [1], [1], [0, 0, 0, 1, 1, 1], [0], [0]>} : vector<2x16x16xf32>, vector<2x16x16xf32>, vector<2x16x16xf32> -> vector<2x16x16xf32>
    "tpu.trace_stop"() : () -> ()
    %c0_39 = arith.constant 0 : index
    %c0_40 = arith.constant 0 : index
    %c0_41 = arith.constant 0 : index
    %34 = vector.load %arg16[%c0_39, %c0_40, %c0_41] : memref<2x16x1xf32, #tpu.memory_space<vmem>>, vector<2x16x1xf32>
    %cst_42 = arith.constant dense<0xFF800000> : vector<2x16xf32>
    %35 = vector.multi_reduction <maximumf>, %33, %cst_42 [2] : vector<2x16x16xf32> to vector<2x16xf32>
    %36 = vector.shape_cast %35 : vector<2x16xf32> to vector<2x16x1xf32>
    %37 = arith.maximumf %34, %36 : vector<2x16x1xf32>
    %38 = arith.subf %34, %37 : vector<2x16x1xf32>
    %39 = math.exp %38 : vector<2x16x1xf32>
    %40 = vector.broadcast %37 : vector<2x16x1xf32> to vector<2x16x16xf32>
    %41 = arith.subf %33, %40 : vector<2x16x16xf32>
    %42 = math.exp %41 : vector<2x16x16xf32>
    %c0_43 = arith.constant 0 : index
    %c0_44 = arith.constant 0 : index
    %c0_45 = arith.constant 0 : index
    %43 = vector.load %arg17[%c0_43, %c0_44, %c0_45] : memref<2x16x1xf32, #tpu.memory_space<vmem>>, vector<2x16x1xf32>
    %44 = arith.mulf %39, %43 : vector<2x16x1xf32>
    %cst_46 = arith.constant dense<0.000000e+00> : vector<2x16xf32>
    %45 = vector.multi_reduction <add>, %42, %cst_46 [2] : vector<2x16x16xf32> to vector<2x16xf32>
    %46 = vector.shape_cast %45 : vector<2x16xf32> to vector<2x16x1xf32>
    %47 = arith.addf %44, %46 : vector<2x16x1xf32>
    %c0_47 = arith.constant 0 : index
    %c0_48 = arith.constant 0 : index
    %c0_49 = arith.constant 0 : index
    %48 = vector.load %arg17[%c0_47, %c0_48, %c0_49] : memref<2x16x1xf32, #tpu.memory_space<vmem>>, vector<2x16x1xf32>
    tpu.vector_store %arg17[%c0_47, %c0_48, %c0_49], %47 {strides = array<i32>} : memref<2x16x1xf32, #tpu.memory_space<vmem>>, vector<2x16x1xf32>,
    %c0_50 = arith.constant 0 : index
    %c0_51 = arith.constant 0 : index
    %c0_52 = arith.constant 0 : index
    %49 = vector.load %arg15[%c0_50, %c0_51, %c0_52] : memref<2x16x16xf32, #tpu.memory_space<vmem>>, vector<2x16x16xf32>
    "tpu.trace_start"() <{level = 10 : i32, message = "hts,hsd->htd"}> : () -> ()
    %cst_53 = arith.constant dense<0.000000e+00> : vector<2x16x16xf32>
    %50 = tpu.matmul %42, %49, %cst_53 {dimension_numbers = #tpu.dot_dimension_numbers<[2], [1], [1], [2], [0, 0, 0, 1, 1, 2], [0], [0]>} : vector<2x16x16xf32>, vector<2x16x16xf32>, vector<2x16x16xf32> -> vector<2x16x16xf32>
    "tpu.trace_stop"() : () -> ()
    %c0_54 = arith.constant 0 : index
    %c0_55 = arith.constant 0 : index
    %c0_56 = arith.constant 0 : index
    %51 = vector.load %arg18[%c0_54, %c0_55, %c0_56] : memref<2x16x16xf32, #tpu.memory_space<vmem>>, vector<2x16x16xf32>
    %52 = vector.broadcast %39 : vector<2x16x1xf32> to vector<2x16x16xf32>
    %53 = arith.mulf %52, %51 : vector<2x16x16xf32>
    %54 = arith.addf %53, %50 : vector<2x16x16xf32>
    %c0_57 = arith.constant 0 : index
    %c0_58 = arith.constant 0 : index
    %c0_59 = arith.constant 0 : index
    %55 = vector.load %arg18[%c0_57, %c0_58, %c0_59] : memref<2x16x16xf32, #tpu.memory_space<vmem>>, vector<2x16x16xf32>
    tpu.vector_store %arg18[%c0_57, %c0_58, %c0_59], %54 {strides = array<i32>} : memref<2x16x16xf32, #tpu.memory_space<vmem>>, vector<2x16x16xf32>,
    %c0_60 = arith.constant 0 : index
    %c0_61 = arith.constant 0 : index
    %c0_62 = arith.constant 0 : index
    %56 = vector.load %arg16[%c0_60, %c0_61, %c0_62] : memref<2x16x1xf32, #tpu.memory_space<vmem>>, vector<2x16x1xf32>
    tpu.vector_store %arg16[%c0_60, %c0_61, %c0_62], %37 {strides = array<i32>} : memref<2x16x1xf32, #tpu.memory_space<vmem>>, vector<2x16x1xf32>,
    %c1_i32 = arith.constant 1 : i32
    %57 = arith.cmpi eq, %arg2, %c1_i32 : i32
    %58 = arith.extui %57 : i1 to i32
    %c0_i32_63 = arith.constant 0 : i32
    %59 = arith.cmpi ne, %58, %c0_i32_63 : i32
    scf.if %59 {
      %c0_64 = arith.constant 0 : index
      %c0_65 = arith.constant 0 : index
      %c0_66 = arith.constant 0 : index
      %60 = vector.load %arg17[%c0_64, %c0_65, %c0_66] : memref<2x16x1xf32, #tpu.memory_space<vmem>>, vector<2x16x1xf32>
      %61 = tpu.reciprocal %60 {approx = true} : vector<2x16x1xf32> -> vector<2x16x1xf32>
      %62 = arith.mulf %60, %61 : vector<2x16x1xf32>
      %cst_67 = arith.constant 2.000000e+00 : f32
      %63 = vector.broadcast %cst_67 : f32 to vector<2x16x1xf32>
      %64 = arith.subf %63, %62 : vector<2x16x1xf32>
      %65 = arith.mulf %61, %64 : vector<2x16x1xf32>
      %c0_68 = arith.constant 0 : index
      %c0_69 = arith.constant 0 : index
      %c0_70 = arith.constant 0 : index
      %66 = vector.load %arg18[%c0_68, %c0_69, %c0_70] : memref<2x16x16xf32, #tpu.memory_space<vmem>>, vector<1x16x16xf32>
      %67 = vector.shape_cast %66 : vector<1x16x16xf32> to vector<16x16xf32>
      %68 = vector.extract_strided_slice %65 {offsets = [0, 0, 0], sizes = [1, 16, 1], strides = [1, 1, 1]} : vector<2x16x1xf32> to vector<1x16x1xf32>
      %69 = vector.shape_cast %68 : vector<1x16x1xf32> to vector<16x1xf32>
      %70 = vector.broadcast %69 : vector<16x1xf32> to vector<16x16xf32>
      %71 = arith.mulf %67, %70 : vector<16x16xf32>
      %c0_71 = arith.constant 0 : index
      %c0_72 = arith.constant 0 : index
      %c0_73 = arith.constant 0 : index
      %72 = vector.load %arg9[%c0_71, %c0_72, %c0_73] : memref<2x16x32xf32, #tpu.memory_space<vmem>>, vector<1x16x32xf32>
      %73 = vector.shape_cast %72 : vector<1x16x32xf32> to vector<16x32xf32>
      %cst_74 = arith.constant dense<0.000000e+00> : vector<16x32xf32>
      %74 = tpu.matmul %71, %73, %cst_74 {dimension_numbers = #tpu.dot_dimension_numbers<[1], [0], [0], [1], [0, 0, 1, 1], [], []>} : vector<16x16xf32>, vector<16x32xf32>, vector<16x32xf32> -> vector<16x32xf32>
      %c1_75 = arith.constant 1 : index
      %c0_76 = arith.constant 0 : index
      %c0_77 = arith.constant 0 : index
      %75 = vector.load %arg18[%c1_75, %c0_76, %c0_77] : memref<2x16x16xf32, #tpu.memory_space<vmem>>, vector<1x16x16xf32>
      %76 = vector.shape_cast %75 : vector<1x16x16xf32> to vector<16x16xf32>
      %77 = vector.extract_strided_slice %65 {offsets = [1, 0, 0], sizes = [1, 16, 1], strides = [1, 1, 1]} : vector<2x16x1xf32> to vector<1x16x1xf32>
      %78 = vector.shape_cast %77 : vector<1x16x1xf32> to vector<16x1xf32>
      %79 = vector.broadcast %78 : vector<16x1xf32> to vector<16x16xf32>
      %80 = arith.mulf %76, %79 : vector<16x16xf32>
      %c1_78 = arith.constant 1 : index
      %c0_79 = arith.constant 0 : index
      %c0_80 = arith.constant 0 : index
      %81 = vector.load %arg9[%c1_78, %c0_79, %c0_80] : memref<2x16x32xf32, #tpu.memory_space<vmem>>, vector<1x16x32xf32>
      %82 = vector.shape_cast %81 : vector<1x16x32xf32> to vector<16x32xf32>
      %cst_81 = arith.constant dense<0.000000e+00> : vector<16x32xf32>
      %83 = tpu.matmul %80, %82, %cst_81 {dimension_numbers = #tpu.dot_dimension_numbers<[1], [0], [0], [1], [0, 0, 1, 1], [], []>} : vector<16x16xf32>, vector<16x32xf32>, vector<16x32xf32> -> vector<16x32xf32>
      %84 = arith.addf %74, %83 : vector<16x32xf32>
      %c0_82 = arith.constant 0 : index
      %c0_83 = arith.constant 0 : index
      %c0_84 = arith.constant 0 : index
      %85 = vector.load %arg3[%c0_82, %c0_83, %c0_84] : memref<1x16x32xf32, #tpu.memory_space<vmem>>, vector<1x16x32xf32>
      %86 = vector.shape_cast %85 : vector<1x16x32xf32> to vector<16x32xf32>
      %87 = arith.addf %84, %86 : vector<16x32xf32>
      %cst_85 = arith.constant dense<0.000000e+00> : vector<16xf32>
      %88 = vector.multi_reduction <add>, %87, %cst_85 [1] : vector<16x32xf32> to vector<16xf32>
      %89 = vector.shape_cast %88 : vector<16xf32> to vector<16x1xf32>
      %cst_86 = arith.constant 3.200000e+01 : f32
      %90 = vector.broadcast %cst_86 : f32 to vector<16x1xf32>
      %91 = arith.divf %89, %90 : vector<16x1xf32>
      %92 = vector.broadcast %91 : vector<16x1xf32> to vector<16x32xf32>
      %93 = arith.subf %87, %92 : vector<16x32xf32>
      %94 = arith.mulf %93, %93 : vector<16x32xf32>
      %cst_87 = arith.constant dense<0.000000e+00> : vector<16xf32>
      %95 = vector.multi_reduction <add>, %94, %cst_87 [1] : vector<16x32xf32> to vector<16xf32>
      %96 = vector.shape_cast %95 : vector<16xf32> to vector<16x1xf32>
      %cst_88 = arith.constant 3.200000e+01 : f32
      %97 = vector.broadcast %cst_88 : f32 to vector<16x1xf32>
      %98 = arith.divf %96, %97 : vector<16x1xf32>
      %99 = vector.broadcast %91 : vector<16x1xf32> to vector<16x32xf32>
      %100 = arith.subf %87, %99 : vector<16x32xf32>
      %cst_89 = arith.constant 9.99999997E-7 : f32
      %101 = vector.broadcast %cst_89 : f32 to vector<16x1xf32>
      %102 = arith.addf %98, %101 : vector<16x1xf32>
      %103 = math.rsqrt %102 : vector<16x1xf32>
      %104 = vector.broadcast %103 : vector<16x1xf32> to vector<16x32xf32>
      %105 = arith.mulf %100, %104 : vector<16x32xf32>
      %c0_90 = arith.constant 0 : index
      %c0_91 = arith.constant 0 : index
      %106 = vector.load %arg10[%c0_90, %c0_91] : memref<1x32xf32, #tpu.memory_space<vmem>>, vector<1x32xf32>
      %107 = vector.broadcast %106 : vector<1x32xf32> to vector<16x32xf32>
      %108 = arith.mulf %105, %107 : vector<16x32xf32>
      %c0_92 = arith.constant 0 : index
      %c0_93 = arith.constant 0 : index
      %109 = vector.load %arg11[%c0_92, %c0_93] : memref<1x32xf32, #tpu.memory_space<vmem>>, vector<1x32xf32>
      %110 = vector.broadcast %109 : vector<1x32xf32> to vector<16x32xf32>
      %111 = arith.addf %108, %110 : vector<16x32xf32>
      %c0_94 = arith.constant 0 : index
      %c0_95 = arith.constant 0 : index
      %c0_96 = arith.constant 0 : index
      %112 = vector.load %arg12[%c0_94, %c0_95, %c0_96] : memref<1x16x32xf32, #tpu.memory_space<vmem>>, vector<1x16x32xf32>
      %113 = vector.shape_cast %112 : vector<1x16x32xf32> to vector<16x32xf32>
      %114 = vector.shape_cast %111 : vector<16x32xf32> to vector<1x16x32xf32>
      tpu.vector_store %arg12[%c0_94, %c0_95, %c0_96], %114 {strides = array<i32>} : memref<1x16x32xf32, #tpu.memory_space<vmem>>, vector<1x16x32xf32>,
    } else {
    }
    return
  }
  func.func @transform_0(%arg0: i32, %arg1: i32, %arg2: i32) -> (i32, i32, i32) {
    %c0_i32 = arith.constant 0 : i32
    %c0_i32_0 = arith.constant 0 : i32
    return %arg0, %arg1, %c0_i32 : i32, i32, i32
  }
  func.func @transform_1(%arg0: i32, %arg1: i32, %arg2: i32) -> (i32, i32, i32) {
    %c0_i32 = arith.constant 0 : i32
    %c0_i32_0 = arith.constant 0 : i32
    return %arg0, %arg2, %c0_i32 : i32, i32, i32
  }
  func.func @transform_2(%arg0: i32, %arg1: i32, %arg2: i32) -> (i32, i32, i32) {
    %c0_i32 = arith.constant 0 : i32
    %c0_i32_0 = arith.constant 0 : i32
    return %arg0, %arg2, %c0_i32 : i32, i32, i32
  }
  func.func @transform_3(%arg0: i32, %arg1: i32, %arg2: i32) -> (i32, i32, i32) {
    %c0_i32 = arith.constant 0 : i32
    %c0_i32_0 = arith.constant 0 : i32
    %c0_i32_1 = arith.constant 0 : i32
    %c0_i32_2 = arith.constant 0 : i32
    return %c0_i32, %c0_i32_0, %c0_i32_1 : i32, i32, i32
  }
  func.func @transform_4(%arg0: i32, %arg1: i32, %arg2: i32) -> (i32, i32, i32) {
    %c0_i32 = arith.constant 0 : i32
    %c0_i32_0 = arith.constant 0 : i32
    %c0_i32_1 = arith.constant 0 : i32
    %c0_i32_2 = arith.constant 0 : i32
    return %c0_i32, %c0_i32_0, %c0_i32_1 : i32, i32, i32
  }
  func.func @transform_5(%arg0: i32, %arg1: i32, %arg2: i32) -> (i32, i32, i32) {
    %c0_i32 = arith.constant 0 : i32
    %c0_i32_0 = arith.constant 0 : i32
    %c0_i32_1 = arith.constant 0 : i32
    %c0_i32_2 = arith.constant 0 : i32
    return %c0_i32, %c0_i32_0, %c0_i32_1 : i32, i32, i32
  }
  func.func @transform_6(%arg0: i32, %arg1: i32, %arg2: i32) -> (i32, i32, i32) {
    %c0_i32 = arith.constant 0 : i32
    %c0_i32_0 = arith.constant 0 : i32
    %c0_i32_1 = arith.constant 0 : i32
    %c0_i32_2 = arith.constant 0 : i32
    return %c0_i32, %c0_i32_0, %c0_i32_1 : i32, i32, i32
  }
  func.func @transform_7(%arg0: i32, %arg1: i32, %arg2: i32) -> (i32, i32) {
    %c0_i32 = arith.constant 0 : i32
    %c0_i32_0 = arith.constant 0 : i32
    %c0_i32_1 = arith.constant 0 : i32
    return %c0_i32, %c0_i32_0 : i32, i32
  }
  func.func @transform_8(%arg0: i32, %arg1: i32, %arg2: i32) -> (i32, i32) {
    %c0_i32 = arith.constant 0 : i32
    %c0_i32_0 = arith.constant 0 : i32
    %c0_i32_1 = arith.constant 0 : i32
    return %c0_i32, %c0_i32_0 : i32, i32
  }
  func.func @transform_9(%arg0: i32, %arg1: i32, %arg2: i32) -> (i32, i32, i32) {
    %c0_i32 = arith.constant 0 : i32
    %c0_i32_0 = arith.constant 0 : i32
    return %arg0, %arg1, %c0_i32 : i32, i32, i32
  }
}

</mosaic_0001>

<llo_original>
// kernel: tpu_custom_call.1
$region0: #{tpu_custom_call.1}
  #allocation0 [shape = 'u32[]', space=smem, size = 0x4, offset = 0x4, fixed_abs, tag = 'smem constant byte address 0x4 - core index']
  #allocation1 [shape = 'u32[72,128]{1,0:T(1,128)}', space=vmem, size = 0x9000, scoped, tag = 'internal scratch']
  #allocation2 [shape = 'f32[2,16,16]{2,1,0:T(8,128)}', space=vmem, size = 0x4000, scoped, tag = 'scratch operand']
  #allocation3 [shape = 'f32[2,16,16]{2,1,0:T(8,128)}', space=vmem, size = 0x4000, scoped, tag = 'scratch operand']
  #allocation4 [shape = 'f32[2,16,16]{2,1,0:T(8,128)}', space=vmem, size = 0x4000, scoped, tag = 'scratch operand']
  #allocation5 [shape = 'f32[2,16,1]{2,1,0:T(8,128)}', space=vmem, size = 0x4000, scoped, tag = 'scratch operand']
  #allocation6 [shape = 'f32[2,16,1]{2,1,0:T(8,128)}', space=vmem, size = 0x4000, scoped, tag = 'scratch operand']
  #allocation7 [shape = 'f32[2,16,16]{2,1,0:T(8,128)}', space=vmem, size = 0x4000, scoped, tag = 'scratch operand']
  %s0 = inlined_call_operand.vmem [shape: f32[2,32,32], index: 0, kind: input, shape index: {}]
  %s1 = inlined_call_operand.vmem [shape: f32[2,32,32], index: 1, kind: input, shape index: {}]
  %s2 = inlined_call_operand.vmem [shape: f32[2,32,32], index: 2, kind: input, shape index: {}]
  %s3 = inlined_call_operand.vmem [shape: f32[2,32,16], index: 3, kind: input, shape index: {}]
  %s4 = inlined_call_operand.vmem [shape: f32[2,32,16], index: 4, kind: input, shape index: {}]
  %s5 = inlined_call_operand.vmem [shape: f32[2,32,16], index: 5, kind: input, shape index: {}]
  %s6 = inlined_call_operand.vmem [shape: f32[2,16,32], index: 6, kind: input, shape index: {}]
  %s7 = inlined_call_operand.vmem [shape: f32[1,32], index: 7, kind: input, shape index: {}]
  %s8 = inlined_call_operand.vmem [shape: f32[1,32], index: 8, kind: input, shape index: {}]
  %s9 = inlined_call_operand.hbm [shape: f32[2,32,32], index: 9, kind: output, shape index: {}]
  %s10 = sld [smem:[#allocation0]]
  $region77: #{tpu_custom_call.1} parent=0
    _
  %s12 = ssub.s32 1, %s10
  %s13 = scalar_select 0, %s12, %s10
  $region1: #{tpu_custom_call.1} parent=0
    #allocation8 [shape = 'u8[16384]{0}', space=vmem, size = 0x4000, scoped, tag = 'output window, operand 0']
    #allocation9 [shape = 's32[2]{0}', space=sflag, size = 0x8, scoped, tag = 'scoped memory for tpu_custom_call.1']
    %14 = vsyncpa [#allocation9], 0
    %s15 = scalar_lea.sflag [#allocation9], 1
    %16 = vsyncpa %s15, 0
    loop: start=0, step=1, limit=10
    $region2: #{tpu_custom_call.1} parent=1 // loop_pre_header
      _
    $region3: #{tpu_custom_call.1} parent=1 // loop_header
      %s18 = sphi 0, %s22
      %p19 = scmp.ge.s32.totalorder %s18, 10
      %s25 = sphi 0, %s44
      %s26 = sphi 0, %s40
      %s27 = sphi 0, %s36
      %s28 = sphi 0, %s25
      %s29 = sphi 0, %s26
      %s30 = sphi 0, %s27
      %s31 = sphi 0, %s28
      %s32 = sphi 0, %s29
      %s33 = sphi 0, %s30
      %s49 = sphi 0, %s51
      %s52 = sphi 0, %s49
      %s53 = sphi 0, %s52
      %s69 = sphi 0, %s53
      %s77 = sphi 0, %s79
      %s80 = sphi 0, %s77
      %s81 = sphi 0, %s80
      %s97 = sphi 0, %s81
      %s105 = sphi 0, %s107
      %s108 = sphi 0, %s105
      %s109 = sphi 0, %s108
      %s125 = sphi 0, %s109
      %s129 = sphi 0, %s129
      %s131 = sphi 0, %s129
      %s132 = sphi 0, %s131
      %s146 = sphi 0, %s132
      %s150 = sphi 0, %s150
      %s152 = sphi 0, %s150
      %s153 = sphi 0, %s152
      %s167 = sphi 0, %s153
      %s171 = sphi 0, %s171
      %s173 = sphi 0, %s171
      %s174 = sphi 0, %s173
      %s188 = sphi 0, %s174
      %s192 = sphi 0, %s192
      %s194 = sphi 0, %s192
      %s195 = sphi 0, %s194
      %s209 = sphi 0, %s195
      %s213 = sphi 0, %s213
      %s215 = sphi 0, %s213
      %s216 = sphi 0, %s215
      %s230 = sphi 0, %s216
      %s234 = sphi 0, %s234
      %s236 = sphi 0, %s234
      %s237 = sphi 0, %s236
      %s251 = sphi 0, %s237
      %s259 = sphi 0, %s261
      %s262 = sphi 0, %s259
      %s263 = sphi 0, %s262
      %s279 = sphi 0, %s263
    $region4: #{tpu_custom_call.1} parent=1 // loop_header_branch
      %21 = sbr.rel (%p19) target = $region8
    $region5: #{tpu_custom_call.1} parent=1 // loop_body
      %s23 = ssub.s32 %s18, 1
      %s24 = ssub.s32 %s18, 2
      %s34 = sadd.s32 1, %s27
      %p35 = scmp.ge.s32.totalorder %s34, 2
      %s36 = scalar_select %p35, 0, %s34
      %s37 = sadd.s32 1, %s26
      %s38 = scalar_select %p35, %s37, %s26
      %p39 = scmp.ge.s32.totalorder %s38, 2
      %s40 = scalar_select %p39, 0, %s38
      %s41 = sadd.s32 1, %s25
      %s42 = scalar_select %p39, %s41, %s25
      %p43 = scmp.ge.s32.totalorder %s42, 2
      %s44 = scalar_select %p43, 0, %s42
      %s45 = ssub.s32 %s25, %s44
      %s46 = ssub.s32 %s26, %s40
      %s47 = sor.u32 %s45, %s46
      %p48 = scmp.eq.s32.totalorder %s47, 0
      %s50 = sadd.s32 %s49, 1
      %s51 = scalar_select %p48, %s49, %s50
      %p54 = pneg %p48
      %p55 = scmp.eq.s32.totalorder %s18, 7
      %p56 = por %p54, %p55
      %p57 = scmp.ne.s32.totalorder %s49, %s52
      %p58 = scmp.eq.s32.totalorder %s18, 0
      %p59 = por %p57, %p58
      %p60 = scmp.ne.s32.totalorder %s49, %s52
      %p61 = scmp.eq.s32.totalorder %s23, 7
      %p62 = por %p60, %p61
      %p63 = scmp.ne.s32.totalorder %s52, %s53
      %p64 = scmp.eq.s32.totalorder %s23, 0
      %p65 = por %p63, %p64
      %p66 = scmp.ne.s32.totalorder %s52, %s53
      %p67 = scmp.eq.s32.totalorder %s24, 7
      %p68 = por %p66, %p67
      %p70 = scmp.ne.s32.totalorder %s53, %s69
      %p71 = scmp.eq.s32.totalorder %s24, 0
      %p72 = por %p70, %p71
      %s73 = ssub.s32 %s25, %s44
      %s74 = ssub.s32 %s27, %s36
      %s75 = sor.u32 %s73, %s74
      %p76 = scmp.eq.s32.totalorder %s75, 0
      %s78 = sadd.s32 %s77, 1
      %s79 = scalar_select %p76, %s77, %s78
      %p82 = pneg %p76
      %p83 = scmp.eq.s32.totalorder %s18, 7
      %p84 = por %p82, %p83
      %p85 = scmp.ne.s32.totalorder %s77, %s80
      %p86 = scmp.eq.s32.totalorder %s18, 0
      %p87 = por %p85, %p86
      %p88 = scmp.ne.s32.totalorder %s77, %s80
      %p89 = scmp.eq.s32.totalorder %s23, 7
      %p90 = por %p88, %p89
      %p91 = scmp.ne.s32.totalorder %s80, %s81
      %p92 = scmp.eq.s32.totalorder %s23, 0
      %p93 = por %p91, %p92
      %p94 = scmp.ne.s32.totalorder %s80, %s81
      %p95 = scmp.eq.s32.totalorder %s24, 7
      %p96 = por %p94, %p95
      %p98 = scmp.ne.s32.totalorder %s81, %s97
      %p99 = scmp.eq.s32.totalorder %s24, 0
      %p100 = por %p98, %p99
      %s101 = ssub.s32 %s25, %s44
      %s102 = ssub.s32 %s27, %s36
      %s103 = sor.u32 %s101, %s102
      %p104 = scmp.eq.s32.totalorder %s103, 0
      %s106 = sadd.s32 %s105, 1
      %s107 = scalar_select %p104, %s105, %s106
      %p110 = pneg %p104
      %p111 = scmp.eq.s32.totalorder %s18, 7
      %p112 = por %p110, %p111
      %p113 = scmp.ne.s32.totalorder %s105, %s108
      %p114 = scmp.eq.s32.totalorder %s18, 0
      %p115 = por %p113, %p114
      %p116 = scmp.ne.s32.totalorder %s105, %s108
      %p117 = scmp.eq.s32.totalorder %s23, 7
      %p118 = por %p116, %p117
      %p119 = scmp.ne.s32.totalorder %s108, %s109
      %p120 = scmp.eq.s32.totalorder %s23, 0
      %p121 = por %p119, %p120
      %p122 = scmp.ne.s32.totalorder %s108, %s109
      %p123 = scmp.eq.s32.totalorder %s24, 7
      %p124 = por %p122, %p123
      %p126 = scmp.ne.s32.totalorder %s109, %s125
      %p127 = scmp.eq.s32.totalorder %s24, 0
      %p128 = por %p126, %p127
      %s130 = sadd.s32 %s129, 1
      %p133 = scmp.eq.s32.totalorder %s18, 7
      %p134 = scmp.ne.s32.totalorder %s129, %s131
      %p135 = scmp.eq.s32.totalorder %s18, 0
      %p136 = por %p134, %p135
      %p137 = scmp.ne.s32.totalorder %s129, %s131
      %p138 = scmp.eq.s32.totalorder %s23, 7
      %p139 = por %p137, %p138
      %p140 = scmp.ne.s32.totalorder %s131, %s132
      %p141 = scmp.eq.s32.totalorder %s23, 0
      %p142 = por %p140, %p141
      %p143 = scmp.ne.s32.totalorder %s131, %s132
      %p144 = scmp.eq.s32.totalorder %s24, 7
      %p145 = por %p143, %p144
      %p147 = scmp.ne.s32.totalorder %s132, %s146
      %p148 = scmp.eq.s32.totalorder %s24, 0
      %p149 = por %p147, %p148
      %s151 = sadd.s32 %s150, 1
      %p154 = scmp.eq.s32.totalorder %s18, 7
      %p155 = scmp.ne.s32.totalorder %s150, %s152
      %p156 = scmp.eq.s32.totalorder %s18, 0
      %p157 = por %p155, %p156
      %p158 = scmp.ne.s32.totalorder %s150, %s152
      %p159 = scmp.eq.s32.totalorder %s23, 7
      %p160 = por %p158, %p159
      %p161 = scmp.ne.s32.totalorder %s152, %s153
      %p162 = scmp.eq.s32.totalorder %s23, 0
      %p163 = por %p161, %p162
      %p164 = scmp.ne.s32.totalorder %s152, %s153
      %p165 = scmp.eq.s32.totalorder %s24, 7
      %p166 = por %p164, %p165
      %p168 = scmp.ne.s32.totalorder %s153, %s167
      %p169 = scmp.eq.s32.totalorder %s24, 0
      %p170 = por %p168, %p169
      %s172 = sadd.s32 %s171, 1
      %p175 = scmp.eq.s32.totalorder %s18, 7
      %p176 = scmp.ne.s32.totalorder %s171, %s173
      %p177 = scmp.eq.s32.totalorder %s18, 0
      %p178 = por %p176, %p177
      %p179 = scmp.ne.s32.totalorder %s171, %s173
      %p180 = scmp.eq.s32.totalorder %s23, 7
      %p181 = por %p179, %p180
      %p182 = scmp.ne.s32.totalorder %s173, %s174
      %p183 = scmp.eq.s32.totalorder %s23, 0
      %p184 = por %p182, %p183
      %p185 = scmp.ne.s32.totalorder %s173, %s174
      %p186 = scmp.eq.s32.totalorder %s24, 7
      %p187 = por %p185, %p186
      %p189 = scmp.ne.s32.totalorder %s174, %s188
      %p190 = scmp.eq.s32.totalorder %s24, 0
      %p191 = por %p189, %p190
      %s193 = sadd.s32 %s192, 1
      %p196 = scmp.eq.s32.totalorder %s18, 7
      %p197 = scmp.ne.s32.totalorder %s192, %s194
      %p198 = scmp.eq.s32.totalorder %s18, 0
      %p199 = por %p197, %p198
      %p200 = scmp.ne.s32.totalorder %s192, %s194
      %p201 = scmp.eq.s32.totalorder %s23, 7
      %p202 = por %p200, %p201
      %p203 = scmp.ne.s32.totalorder %s194, %s195
      %p204 = scmp.eq.s32.totalorder %s23, 0
      %p205 = por %p203, %p204
      %p206 = scmp.ne.s32.totalorder %s194, %s195
      %p207 = scmp.eq.s32.totalorder %s24, 7
      %p208 = por %p206, %p207
      %p210 = scmp.ne.s32.totalorder %s195, %s209
      %p211 = scmp.eq.s32.totalorder %s24, 0
      %p212 = por %p210, %p211
      %s214 = sadd.s32 %s213, 1
      %p217 = scmp.eq.s32.totalorder %s18, 7
      %p218 = scmp.ne.s32.totalorder %s213, %s215
      %p219 = scmp.eq.s32.totalorder %s18, 0
      %p220 = por %p218, %p219
      %p221 = scmp.ne.s32.totalorder %s213, %s215
      %p222 = scmp.eq.s32.totalorder %s23, 7
      %p223 = por %p221, %p222
      %p224 = scmp.ne.s32.totalorder %s215, %s216
      %p225 = scmp.eq.s32.totalorder %s23, 0
      %p226 = por %p224, %p225
      %p227 = scmp.ne.s32.totalorder %s215, %s216
      %p228 = scmp.eq.s32.totalorder %s24, 7
      %p229 = por %p227, %p228
      %p231 = scmp.ne.s32.totalorder %s216, %s230
      %p232 = scmp.eq.s32.totalorder %s24, 0
      %p233 = por %p231, %p232
      %s235 = sadd.s32 %s234, 1
      %p238 = scmp.eq.s32.totalorder %s18, 7
      %p239 = scmp.ne.s32.totalorder %s234, %s236
      %p240 = scmp.eq.s32.totalorder %s18, 0
      %p241 = por %p239, %p240
      %p242 = scmp.ne.s32.totalorder %s234, %s236
      %p243 = scmp.eq.s32.totalorder %s23, 7
      %p244 = por %p242, %p243
      %p245 = scmp.ne.s32.totalorder %s236, %s237
      %p246 = scmp.eq.s32.totalorder %s23, 0
      %p247 = por %p245, %p246
      %p248 = scmp.ne.s32.totalorder %s236, %s237
      %p249 = scmp.eq.s32.totalorder %s24, 7
      %p250 = por %p248, %p249
      %p252 = scmp.ne.s32.totalorder %s237, %s251
      %p253 = scmp.eq.s32.totalorder %s24, 0
      %p254 = por %p252, %p253
      %s255 = ssub.s32 %s25, %s44
      %s256 = ssub.s32 %s26, %s40
      %s257 = sor.u32 %s255, %s256
      %p258 = scmp.eq.s32.totalorder %s257, 0
      %s260 = sadd.s32 %s259, 1
      %s261 = scalar_select %p258, %s259, %s260
      %p264 = pneg %p258
      %p265 = scmp.eq.s32.totalorder %s18, 7
      %p266 = por %p264, %p265
      %p267 = scmp.ne.s32.totalorder %s259, %s262
      %p268 = scmp.eq.s32.totalorder %s18, 0
      %p269 = por %p267, %p268
      %p270 = scmp.ne.s32.totalorder %s259, %s262
      %p271 = scmp.eq.s32.totalorder %s23, 7
      %p272 = por %p270, %p271
      %p273 = scmp.ne.s32.totalorder %s262, %s263
      %p274 = scmp.eq.s32.totalorder %s23, 0
      %p275 = por %p273, %p274
      %p276 = scmp.ne.s32.totalorder %s262, %s263
      %p277 = scmp.eq.s32.totalorder %s24, 7
      %p278 = por %p276, %p277
      %p280 = scmp.ne.s32.totalorder %s263, %s279
      %p281 = scmp.eq.s32.totalorder %s24, 0
      %p282 = por %p280, %p281
      %p283 = scmp.le.s32.totalorder 1, %s18
      %p284 = scmp.lt.s32.totalorder %s18, 9
      %p285 = pnand %p283, %p284
      %p286 = pneg %p285
      // Predicated region
      $region9: #{tpu_custom_call.1} parent=5 // pred_check
        _
      $region10: #{tpu_custom_call.1} parent=5 // pred_check_branch
        %288 = sbr.rel (%p285) target = $region12
      $region11: #{tpu_custom_call.1} parent=5 // pred_region
        %s289 = ssub.s32 %s18, 1
        // Predicated region
        $region13: #{tpu_custom_call.1} parent=11 // pred_check
          %p290 = pneg %p142
        $region14: #{tpu_custom_call.1} parent=11 // pred_check_branch
          %292 = sbr.rel (%p290) target = $region16
        $region15: #{tpu_custom_call.1} parent=11 // pred_region
          _
        $region16: #{tpu_custom_call.1} parent=11 // pred_fallthru
          _
        // Predicated region
        $region17: #{tpu_custom_call.1} parent=11 // pred_check
          %p293 = pneg %p163
        $region18: #{tpu_custom_call.1} parent=11 // pred_check_branch
          %295 = sbr.rel (%p293) target = $region20
        $region19: #{tpu_custom_call.1} parent=11 // pred_region
          _
        $region20: #{tpu_custom_call.1} parent=11 // pred_fallthru
          _
        // Predicated region
        $region21: #{tpu_custom_call.1} parent=11 // pred_check
          %p296 = pneg %p184
        $region22: #{tpu_custom_call.1} parent=11 // pred_check_branch
          %298 = sbr.rel (%p296) target = $region24
        $region23: #{tpu_custom_call.1} parent=11 // pred_region
          _
        $region24: #{tpu_custom_call.1} parent=11 // pred_fallthru
          _
        // Predicated region
        $region25: #{tpu_custom_call.1} parent=11 // pred_check
          %p299 = pneg %p205
        $region26: #{tpu_custom_call.1} parent=11 // pred_check_branch
          %301 = sbr.rel (%p299) target = $region28
        $region27: #{tpu_custom_call.1} parent=11 // pred_region
          _
        $region28: #{tpu_custom_call.1} parent=11 // pred_fallthru
          _
        // Predicated region
        $region29: #{tpu_custom_call.1} parent=11 // pred_check
          %p302 = pneg %p226
        $region30: #{tpu_custom_call.1} parent=11 // pred_check_branch
          %304 = sbr.rel (%p302) target = $region32
        $region31: #{tpu_custom_call.1} parent=11 // pred_region
          _
        $region32: #{tpu_custom_call.1} parent=11 // pred_fallthru
          _
        // Predicated region
        $region33: #{tpu_custom_call.1} parent=11 // pred_check
          %p305 = pneg %p247
        $region34: #{tpu_custom_call.1} parent=11 // pred_check_branch
          %307 = sbr.rel (%p305) target = $region36
        $region35: #{tpu_custom_call.1} parent=11 // pred_region
          _
        $region36: #{tpu_custom_call.1} parent=11 // pred_fallthru
          _
      $region12: #{tpu_custom_call.1} parent=5 // pred_fallthru
        _
      %p308 = scmp.lt.s32.totalorder %s18, 8
      // Predicated region
      $region37: #{tpu_custom_call.1} parent=5 // pred_check
        %p309 = pneg %p308
      $region38: #{tpu_custom_call.1} parent=5 // pred_check_branch
        %311 = sbr.rel (%p309) target = $region40
      $region39: #{tpu_custom_call.1} parent=5 // pred_region
        // Predicated region
        $region41: #{tpu_custom_call.1} parent=39 // pred_check
          %p312 = pneg %p59
        $region42: #{tpu_custom_call.1} parent=39 // pred_check_branch
          %314 = sbr.rel (%p312) target = $region44
        $region43: #{tpu_custom_call.1} parent=39 // pred_region
          %s315 = smul.u32 2, %s26
          %p316 = scmp.lt.s32.totalorder %s25, 1
          %s317 = scalar_select %p316, %s25, 1
          %p318 = scmp.lt.s32.totalorder %s315, 3
          %s319 = scalar_select %p318, %s315, 3
          %s320 = smul.addr %s317, 4
          %s321 = sadd.s32 %s319, %s320
          %s322 = smul.addr %s321, 8
          %s323 = scalar_lea.vmem %s0, %s322
          %s324 = smul.u32 2, %s26
        $region44: #{tpu_custom_call.1} parent=39 // pred_fallthru
          _
        // Predicated region
        $region45: #{tpu_custom_call.1} parent=39 // pred_check
          %p325 = pneg %p87
        $region46: #{tpu_custom_call.1} parent=39 // pred_check_branch
          %327 = sbr.rel (%p325) target = $region48
        $region47: #{tpu_custom_call.1} parent=39 // pred_region
          %s328 = smul.u32 2, %s27
          %p329 = scmp.lt.s32.totalorder %s25, 1
          %s330 = scalar_select %p329, %s25, 1
          %p331 = scmp.lt.s32.totalorder %s328, 3
          %s332 = scalar_select %p331, %s328, 3
          %s333 = smul.addr %s330, 4
          %s334 = sadd.s32 %s332, %s333
          %s335 = smul.addr %s334, 8
          %s336 = scalar_lea.vmem %s1, %s335
          %s337 = smul.u32 2, %s27
        $region48: #{tpu_custom_call.1} parent=39 // pred_fallthru
          _
        // Predicated region
        $region49: #{tpu_custom_call.1} parent=39 // pred_check
          %p338 = pneg %p115
        $region50: #{tpu_custom_call.1} parent=39 // pred_check_branch
          %340 = sbr.rel (%p338) target = $region52
        $region51: #{tpu_custom_call.1} parent=39 // pred_region
          %s341 = smul.u32 2, %s27
          %p342 = scmp.lt.s32.totalorder %s25, 1
          %s343 = scalar_select %p342, %s25, 1
          %p344 = scmp.lt.s32.totalorder %s341, 3
          %s345 = scalar_select %p344, %s341, 3
          %s346 = smul.addr %s343, 4
          %s347 = sadd.s32 %s345, %s346
          %s348 = smul.addr %s347, 8
          %s349 = scalar_lea.vmem %s2, %s348
          %s350 = smul.u32 2, %s27
        $region52: #{tpu_custom_call.1} parent=39 // pred_fallthru
          _
      $region40: #{tpu_custom_call.1} parent=5 // pred_fallthru
        _
      %p351 = scmp.le.s32.totalorder 1, %s18
      %p352 = scmp.lt.s32.totalorder %s18, 9
      %p353 = pnand %p351, %p352
      %p354 = pneg %p353
      // Predicated region
      $region53: #{tpu_custom_call.1} parent=5 // pred_check
        _
      $region54: #{tpu_custom_call.1} parent=5 // pred_check_branch
        %356 = sbr.rel (%p353) target = $region56
      $region55: #{tpu_custom_call.1} parent=5 // pred_region
        %s357 = ssub.s32 %s18, 1
        %s358 = smul.u32 2, %s29
        %p359 = scmp.lt.s32.totalorder %s28, 1
        %s360 = scalar_select %p359, %s28, 1
        %p361 = scmp.lt.s32.totalorder %s358, 3
        %s362 = scalar_select %p361, %s358, 3
        %s363 = smul.addr %s360, 4
        %s364 = sadd.s32 %s362, %s363
        %s365 = smul.addr %s364, 8
        %s366 = scalar_lea.vmem %s0, %s365
        %p367 = pneg %p65
        %p368 = pneg %p62
        %s369 = smul.u32 2, %s30
        %p370 = scmp.lt.s32.totalorder %s28, 1
        %s371 = scalar_select %p370, %s28, 1
        %p372 = scmp.lt.s32.totalorder %s369, 3
        %s373 = scalar_select %p372, %s369, 3
        %s374 = smul.addr %s371, 4
        %s375 = sadd.s32 %s373, %s374
        %s376 = smul.addr %s375, 8
        %s377 = scalar_lea.vmem %s1, %s376
        %p378 = pneg %p93
        %p379 = pneg %p90
        %s380 = smul.u32 2, %s30
        %p381 = scmp.lt.s32.totalorder %s28, 1
        %s382 = scalar_select %p381, %s28, 1
        %p383 = scmp.lt.s32.totalorder %s380, 3
        %s384 = scalar_select %p383, %s380, 3
        %s385 = smul.addr %s382, 4
        %s386 = sadd.s32 %s384, %s385
        %s387 = smul.addr %s386, 8
        %s388 = scalar_lea.vmem %s2, %s387
        %p389 = pneg %p121
        %p390 = pneg %p118
        %p391 = pneg %p142
        %p392 = pneg %p139
        %p393 = pneg %p163
        %p394 = pneg %p160
        %p395 = pneg %p184
        %p396 = pneg %p181
        %p397 = pneg %p205
        %p398 = pneg %p202
        %p399 = pneg %p226
        %p400 = pneg %p223
        %p401 = pneg %p247
        %p402 = pneg %p244
        %p403 = pneg %p275
        %p404 = pneg %p272
        %s405 = sand.u32 %s262, 1
        %s406 = scalar_lea.sflag [#allocation9], %s405
        %s407 = sand.u32 %s262, 1
        %s408 = smul.addr %s407, 16
        %s409 = scalar_lea.vmem [#allocation8], %s408
        %s410 = smul.u32 2, %s29
        %p411 = scmp.lt.s32.totalorder %s28, 1
        %s412 = scalar_select %p411, %s28, 1
        %p413 = scmp.lt.s32.totalorder %s410, 3
        %s414 = scalar_select %p413, %s410, 3
        %s415 = smul.addr %s412, 4
        %s416 = sadd.s32 %s414, %s415
        %s417 = smul.addr %s416, 8
        %s418 = scalar_lea.vmem %s0, %s417
        %s419 = smul.u32 2, %s29
        %s420 = smul.u32 2, %s30
        %p421 = scmp.lt.s32.totalorder %s28, 1
        %s422 = scalar_select %p421, %s28, 1
        %p423 = scmp.lt.s32.totalorder %s420, 3
        %s424 = scalar_select %p423, %s420, 3
        %s425 = smul.addr %s422, 4
        %s426 = sadd.s32 %s424, %s425
        %s427 = smul.addr %s426, 8
        %s428 = scalar_lea.vmem %s1, %s427
        %s429 = smul.u32 2, %s30
        %s430 = smul.u32 2, %s30
        %p431 = scmp.lt.s32.totalorder %s28, 1
        %s432 = scalar_select %p431, %s28, 1
        %p433 = scmp.lt.s32.totalorder %s430, 3
        %s434 = scalar_select %p433, %s430, 3
        %s435 = smul.addr %s432, 4
        %s436 = sadd.s32 %s434, %s435
        %s437 = smul.addr %s436, 8
        %s438 = scalar_lea.vmem %s2, %s437
        %s439 = smul.u32 2, %s30
        %s440 = smul.u32 2, %s29
        %p441 = scmp.eq.s32.totalorder %s30, 0
        // Predicated region
        $region57: #{tpu_custom_call.1} parent=55 // pred_check
          %p442 = pneg %p441
        $region58: #{tpu_custom_call.1} parent=55 // pred_check_branch
          %444 = sbr.rel (%p442) target = $region60
        $region59: #{tpu_custom_call.1} parent=55 // pred_region
          %vm445 = vcmask 7168
          %446 = vst.msk [vmem:[#allocation5] sm:$0xff] %vm445, -inf
          %447 = vst.msk [vmem:[#allocation5 + $0x8] sm:$0xff] %vm445, -inf
          %448 = vst.msk [vmem:[#allocation5 + $0x10] sm:$0xff] %vm445, -inf
          %449 = vst.msk [vmem:[#allocation5 + $0x18] sm:$0xff] %vm445, -inf
          %450 = vst.msk [vmem:[#allocation6] sm:$0xff] %vm445, 0.0
          %451 = vst.msk [vmem:[#allocation6 + $0x8] sm:$0xff] %vm445, 0.0
          %452 = vst.msk [vmem:[#allocation6 + $0x10] sm:$0xff] %vm445, 0.0
          %453 = vst.msk [vmem:[#allocation6 + $0x18] sm:$0xff] %vm445, 0.0
          %vm454 = vcmask 130048
          %455 = vst.msk [vmem:[#allocation7] sm:$0xff] %vm454, 0.0
          %456 = vst.msk [vmem:[#allocation7 + $0x8] sm:$0xff] %vm454, 0.0
          %457 = vst.msk [vmem:[#allocation7 + $0x10] sm:$0xff] %vm454, 0.0
          %458 = vst.msk [vmem:[#allocation7 + $0x18] sm:$0xff] %vm454, 0.0
          %v459 = vld [vmem:[%s418] sm:$0xff]
          %v460 = vld [vmem:[%s418 + $0x8] sm:$0xff]
          %v461 = vld [vmem:[%s3] sm:$0xff]
          %v462 = vld [vmem:[%s3 + $0x8] sm:$0xff]
          %v463 = vld [vmem:[%s3 + $0x10] sm:$0xff]
          %v464 = vld [vmem:[%s3 + $0x18] sm:$0xff]
          %vm465 = vcmask 261120
          %v467 = vsel %vm465, %v459, 0
          %v470 = vsel %vm465, %v460, 0
          %472 = vmatpush.msra.mxu0 0.0
          %473 = vmatpush.msra.mxu0 0.0
          %474 = vmatpush.msra.mxu0 0.0
          %475 = vmatpush.msra.mxu0 0.0
          %476 = vmatpush.msra.mxu0 0.0
          %477 = vmatpush.msra.mxu0 0.0
          %478 = vmatpush.msra.mxu0 0.0
          %479 = vmatpush.msra.mxu0 0.0
          %480 = vmatpush.msra.mxu0 0.0
          %481 = vmatpush.msra.mxu0 0.0
          %482 = vmatpush.msra.mxu0 0.0
          %483 = vmatpush.msra.mxu0 0.0
          %484 = vmatpush.msra.mxu0 %v464
          %485 = vmatpush.msra.mxu0 %v463
          %486 = vmatpush.msra.mxu0 %v462
          %487 = vmatpush.msra.mxu0 %v461
          %488 = vmatmul.f32.gmra.mxu0 %v467
          %v489 = vpop.f32.mrf.mxu0
          %v490 = vadd.f32 0.0, %v489
          %491 = vmatmul.f32.gmra.mxu0 %v470
          %v492 = vpop.f32.mrf.mxu0
          %v493 = vadd.f32 0.0, %v492
          %494 = vdwg.mxu0
          %v495 = vmul.f32 %v490, 0.25
          %v496 = vmul.f32 %v493, 0.25
          %497 = vst.msk [vmem:[#allocation2] sm:$0xff] %vm454, %v495
          %498 = vst.msk [vmem:[#allocation2 + $0x8] sm:$0xff] %vm454, %v496
          %s499 = scalar_lea.vmem %s3, 32
          %v500 = vld [vmem:[%s499] sm:$0xff]
          %v501 = vld [vmem:[%s499 + $0x8] sm:$0xff]
          %v502 = vld [vmem:[%s499 + $0x10] sm:$0xff]
          %v503 = vld [vmem:[%s499 + $0x18] sm:$0xff]
          %504 = vmatpush.msra.mxu0 0.0
          %505 = vmatpush.msra.mxu0 0.0
          %506 = vmatpush.msra.mxu0 0.0
          %507 = vmatpush.msra.mxu0 0.0
          %508 = vmatpush.msra.mxu0 0.0
          %509 = vmatpush.msra.mxu0 0.0
          %510 = vmatpush.msra.mxu0 0.0
          %511 = vmatpush.msra.mxu0 0.0
          %512 = vmatpush.msra.mxu0 0.0
          %513 = vmatpush.msra.mxu0 0.0
          %514 = vmatpush.msra.mxu0 0.0
          %515 = vmatpush.msra.mxu0 0.0
          %516 = vmatpush.msra.mxu0 %v503
          %517 = vmatpush.msra.mxu0 %v502
          %518 = vmatpush.msra.mxu0 %v501
          %519 = vmatpush.msra.mxu0 %v500
          %520 = vmatmul.f32.gmra.mxu0 %v467
          %v521 = vpop.f32.mrf.mxu0
          %v522 = vadd.f32 0.0, %v521
          %523 = vmatmul.f32.gmra.mxu0 %v470
          %v524 = vpop.f32.mrf.mxu0
          %v525 = vadd.f32 0.0, %v524
          %526 = vdwg.mxu0
          %v527 = vmul.f32 %v522, 0.25
          %v528 = vmul.f32 %v525, 0.25
          %s529 = scalar_lea.vmem [#allocation2], 16
          %530 = vst.msk [vmem:[%s529] sm:$0xff] %vm454, %v527
          %531 = vst.msk [vmem:[%s529 + $0x8] sm:$0xff] %vm454, %v528
        $region60: #{tpu_custom_call.1} parent=55 // pred_fallthru
          _
        %v532 = vld [vmem:[%s428] sm:$0xff]
        %v533 = vld [vmem:[%s428 + $0x8] sm:$0xff]
        %v534 = vld [vmem:[%s438] sm:$0xff]
        %v535 = vld [vmem:[%s438 + $0x8] sm:$0xff]
        %v536 = vld [vmem:[%s4] sm:$0xff]
        %v537 = vld [vmem:[%s4 + $0x8] sm:$0xff]
        %v538 = vld [vmem:[%s4 + $0x10] sm:$0xff]
        %v539 = vld [vmem:[%s4 + $0x18] sm:$0xff]
        %vm540 = vcmask 261120
        %v542 = vsel %vm540, %v532, 0
        %v545 = vsel %vm540, %v533, 0
        %547 = vmatpush.msra.mxu0 0.0
        %548 = vmatpush.msra.mxu0 0.0
        %549 = vmatpush.msra.mxu0 0.0
        %550 = vmatpush.msra.mxu0 0.0
        %551 = vmatpush.msra.mxu0 0.0
        %552 = vmatpush.msra.mxu0 0.0
        %553 = vmatpush.msra.mxu0 0.0
        %554 = vmatpush.msra.mxu0 0.0
        %555 = vmatpush.msra.mxu0 0.0
        %556 = vmatpush.msra.mxu0 0.0
        %557 = vmatpush.msra.mxu0 0.0
        %558 = vmatpush.msra.mxu0 0.0
        %559 = vmatpush.msra.mxu0 %v539
        %560 = vmatpush.msra.mxu0 %v538
        %561 = vmatpush.msra.mxu0 %v537
        %562 = vmatpush.msra.mxu0 %v536
        %563 = vmatmul.f32.gmra.mxu0 %v542
        %v564 = vpop.f32.mrf.mxu0
        %v565 = vadd.f32 0.0, %v564
        %566 = vmatmul.f32.gmra.mxu0 %v545
        %v567 = vpop.f32.mrf.mxu0
        %v568 = vadd.f32 0.0, %v567
        %569 = vdwg.mxu0
        %vm570 = vcmask 130048
        %571 = vst.msk [vmem:[#allocation3] sm:$0xff] %vm570, %v565
        %572 = vst.msk [vmem:[#allocation3 + $0x8] sm:$0xff] %vm570, %v568
        %v573 = vld [vmem:[%s5] sm:$0xff]
        %v574 = vld [vmem:[%s5 + $0x8] sm:$0xff]
        %v575 = vld [vmem:[%s5 + $0x10] sm:$0xff]
        %v576 = vld [vmem:[%s5 + $0x18] sm:$0xff]
        %v578 = vsel %vm540, %v534, 0
        %v581 = vsel %vm540, %v535, 0
        %583 = vmatpush.msra.mxu0 0.0
        %584 = vmatpush.msra.mxu0 0.0
        %585 = vmatpush.msra.mxu0 0.0
        %586 = vmatpush.msra.mxu0 0.0
        %587 = vmatpush.msra.mxu0 0.0
        %588 = vmatpush.msra.mxu0 0.0
        %589 = vmatpush.msra.mxu0 0.0
        %590 = vmatpush.msra.mxu0 0.0
        %591 = vmatpush.msra.mxu0 0.0
        %592 = vmatpush.msra.mxu0 0.0
        %593 = vmatpush.msra.mxu0 0.0
        %594 = vmatpush.msra.mxu0 0.0
        %595 = vmatpush.msra.mxu0 %v576
        %596 = vmatpush.msra.mxu0 %v575
        %597 = vmatpush.msra.mxu0 %v574
        %598 = vmatpush.msra.mxu0 %v573
        %599 = vmatmul.f32.gmra.mxu0 %v578
        %v600 = vpop.f32.mrf.mxu0
        %v601 = vadd.f32 0.0, %v600
        %602 = vmatmul.f32.gmra.mxu0 %v581
        %v603 = vpop.f32.mrf.mxu0
        %v604 = vadd.f32 0.0, %v603
        %605 = vdwg.mxu0
        %606 = vst.msk [vmem:[#allocation4] sm:$0xff] %vm570, %v601
        %607 = vst.msk [vmem:[#allocation4 + $0x8] sm:$0xff] %vm570, %v604
        %s608 = scalar_lea.vmem %s4, 32
        %v609 = vld [vmem:[%s608] sm:$0xff]
        %v610 = vld [vmem:[%s608 + $0x8] sm:$0xff]
        %v611 = vld [vmem:[%s608 + $0x10] sm:$0xff]
        %v612 = vld [vmem:[%s608 + $0x18] sm:$0xff]
        %613 = vmatpush.msra.mxu0 0.0
        %614 = vmatpush.msra.mxu0 0.0
        %615 = vmatpush.msra.mxu0 0.0
        %616 = vmatpush.msra.mxu0 0.0
        %617 = vmatpush.msra.mxu0 0.0
        %618 = vmatpush.msra.mxu0 0.0
        %619 = vmatpush.msra.mxu0 0.0
        %620 = vmatpush.msra.mxu0 0.0
        %621 = vmatpush.msra.mxu0 0.0
        %622 = vmatpush.msra.mxu0 0.0
        %623 = vmatpush.msra.mxu0 0.0
        %624 = vmatpush.msra.mxu0 0.0
        %625 = vmatpush.msra.mxu0 %v612
        %626 = vmatpush.msra.mxu0 %v611
        %627 = vmatpush.msra.mxu0 %v610
        %628 = vmatpush.msra.mxu0 %v609
        %629 = vmatmul.f32.gmra.mxu0 %v542
        %v630 = vpop.f32.mrf.mxu0
        %v631 = vadd.f32 0.0, %v630
        %632 = vmatmul.f32.gmra.mxu0 %v545
        %v633 = vpop.f32.mrf.mxu0
        %v634 = vadd.f32 0.0, %v633
        %635 = vdwg.mxu0
        %s636 = scalar_lea.vmem [#allocation3], 16
        %637 = vst.msk [vmem:[%s636] sm:$0xff] %vm570, %v631
        %638 = vst.msk [vmem:[%s636 + $0x8] sm:$0xff] %vm570, %v634
        %s639 = scalar_lea.vmem %s5, 32
        %v640 = vld [vmem:[%s639] sm:$0xff]
        %v641 = vld [vmem:[%s639 + $0x8] sm:$0xff]
        %v642 = vld [vmem:[%s639 + $0x10] sm:$0xff]
        %v643 = vld [vmem:[%s639 + $0x18] sm:$0xff]
        %644 = vmatpush.msra.mxu0 0.0
        %645 = vmatpush.msra.mxu0 0.0
        %646 = vmatpush.msra.mxu0 0.0
        %647 = vmatpush.msra.mxu0 0.0
        %648 = vmatpush.msra.mxu0 0.0
        %649 = vmatpush.msra.mxu0 0.0
        %650 = vmatpush.msra.mxu0 0.0
        %651 = vmatpush.msra.mxu0 0.0
        %652 = vmatpush.msra.mxu0 0.0
        %653 = vmatpush.msra.mxu0 0.0
        %654 = vmatpush.msra.mxu0 0.0
        %655 = vmatpush.msra.mxu0 0.0
        %656 = vmatpush.msra.mxu0 %v643
        %657 = vmatpush.msra.mxu0 %v642
        %658 = vmatpush.msra.mxu0 %v641
        %659 = vmatpush.msra.mxu0 %v640
        %660 = vmatmul.f32.gmra.mxu0 %v578
        %v661 = vpop.f32.mrf.mxu0
        %v662 = vadd.f32 0.0, %v661
        %663 = vmatmul.f32.gmra.mxu0 %v581
        %v664 = vpop.f32.mrf.mxu0
        %v665 = vadd.f32 0.0, %v664
        %666 = vdwg.mxu0
        %s667 = scalar_lea.vmem [#allocation4], 16
        %668 = vst.msk [vmem:[%s667] sm:$0xff] %vm570, %v662
        %669 = vst.msk [vmem:[%s667 + $0x8] sm:$0xff] %vm570, %v665
        %v670 = vld [vmem:[#allocation2] sm:$0xff]
        %v671 = vld [vmem:[#allocation2 + $0x8] sm:$0xff]
        %v672 = vld [vmem:[#allocation2 + $0x10] sm:$0xff]
        %v673 = vld [vmem:[#allocation2 + $0x18] sm:$0xff]
        %v674 = vld [vmem:[#allocation3] sm:$0xff]
        %v675 = vld [vmem:[#allocation3 + $0x8] sm:$0xff]
        %v676 = vld [vmem:[#allocation3 + $0x10] sm:$0xff]
        %v677 = vld [vmem:[#allocation3 + $0x18] sm:$0xff]
        %v679 = vsel %vm570, %v670, 0
        %v682 = vsel %vm570, %v671, 0
        %v685 = vsel %vm570, %v674, 0
        %v688 = vsel %vm570, %v675, 0
        %690 = vmatpush.xpose.msra.mxu0 0.0
        %691 = vmatpush.xpose.msra.mxu0 0.0
        %692 = vmatpush.xpose.msra.mxu0 0.0
        %693 = vmatpush.xpose.msra.mxu0 0.0
        %694 = vmatpush.xpose.msra.mxu0 0.0
        %695 = vmatpush.xpose.msra.mxu0 0.0
        %696 = vmatpush.xpose.msra.mxu0 0.0
        %697 = vmatpush.xpose.msra.mxu0 0.0
        %698 = vmatpush.xpose.msra.mxu0 0.0
        %699 = vmatpush.xpose.msra.mxu0 0.0
        %700 = vmatpush.xpose.msra.mxu0 0.0
        %701 = vmatpush.xpose.msra.mxu0 0.0
        %702 = vmatpush.xpose.msra.mxu0 0.0
        %703 = vmatpush.xpose.msra.mxu0 0.0
        %704 = vmatpush.xpose.msra.mxu0 %v688
        %705 = vmatpush.xpose.msra.mxu0 %v685
        %706 = vmatmul.f32.gmra.mxu0 %v679
        %v707 = vpop.f32.mrf.mxu0
        %v708 = vadd.f32 0.0, %v707
        %709 = vmatmul.f32.gmra.mxu0 %v682
        %v710 = vpop.f32.mrf.mxu0
        %v711 = vadd.f32 0.0, %v710
        %712 = vdwg.mxu0
        %v714 = vsel %vm570, %v672, 0
        %v717 = vsel %vm570, %v673, 0
        %v720 = vsel %vm570, %v676, 0
        %v723 = vsel %vm570, %v677, 0
        %725 = vmatpush.xpose.msra.mxu0 0.0
        %726 = vmatpush.xpose.msra.mxu0 0.0
        %727 = vmatpush.xpose.msra.mxu0 0.0
        %728 = vmatpush.xpose.msra.mxu0 0.0
        %729 = vmatpush.xpose.msra.mxu0 0.0
        %730 = vmatpush.xpose.msra.mxu0 0.0
        %731 = vmatpush.xpose.msra.mxu0 0.0
        %732 = vmatpush.xpose.msra.mxu0 0.0
        %733 = vmatpush.xpose.msra.mxu0 0.0
        %734 = vmatpush.xpose.msra.mxu0 0.0
        %735 = vmatpush.xpose.msra.mxu0 0.0
        %736 = vmatpush.xpose.msra.mxu0 0.0
        %737 = vmatpush.xpose.msra.mxu0 0.0
        %738 = vmatpush.xpose.msra.mxu0 0.0
        %739 = vmatpush.xpose.msra.mxu0 %v723
        %740 = vmatpush.xpose.msra.mxu0 %v720
        %741 = vmatmul.f32.gmra.mxu0 %v714
        %v742 = vpop.f32.mrf.mxu0
        %v743 = vadd.f32 0.0, %v742
        %744 = vmatmul.f32.gmra.mxu0 %v717
        %v745 = vpop.f32.mrf.mxu0
        %v746 = vadd.f32 0.0, %v745
        %747 = vdwg.mxu0
        %v748 = vld [vmem:[#allocation5] sm:$0xff]
        %v749 = vld [vmem:[#allocation5 + $0x8] sm:$0xff]
        %v750 = vld [vmem:[#allocation5 + $0x10] sm:$0xff]
        %v751 = vld [vmem:[#allocation5 + $0x18] sm:$0xff]
        %v752 = vsel %vm570, %v708, -inf
        %753 = vmax.xlane.f32.xlu0 %v752
        %v754 = vpop.xlane.xlu0 %753
        %v755 = vsel %vm570, %v711, -inf
        %756 = vmax.xlane.f32.xlu0 %v755
        %v757 = vpop.xlane.xlu0 %756
        %v758 = vsel %vm570, %v743, -inf
        %759 = vmax.xlane.f32.xlu0 %v758
        %v760 = vpop.xlane.xlu0 %759
        %v761 = vsel %vm570, %v746, -inf
        %762 = vmax.xlane.f32.xlu0 %v761
        %v763 = vpop.xlane.xlu0 %762
        %v764 = vmax.f32 %v748, %v754
        %v765 = vmax.f32 %v749, %v757
        %v766 = vmax.f32 %v750, %v760
        %v767 = vmax.f32 %v751, %v763
        %v768 = vsub.f32 %v748, %v764
        %v769 = vsub.f32 %v749, %v765
        %v770 = vsub.f32 %v750, %v766
        %v771 = vsub.f32 %v751, %v767
        %v772 = vmul.f32 %v768, 1.442695
        %v773 = vpow.pop %v772
        %v774 = vmul.f32 %v769, 1.442695
        %v775 = vpow.pop %v774
        %v776 = vmul.f32 %v770, 1.442695
        %v777 = vpow.pop %v776
        %v778 = vmul.f32 %v771, 1.442695
        %v779 = vpow.pop %v778
        %781 = vset.pattern.permute.xlu0 0
        %782 = vperm.xlu0 %781, %v764
        %v783 = vpop.permute.xlu0 %782
        %786 = vset.pattern.permute.xlu0 0
        %787 = vperm.xlu0 %786, %v765
        %v788 = vpop.permute.xlu0 %787
        %791 = vset.pattern.permute.xlu0 0
        %792 = vperm.xlu0 %791, %v766
        %v793 = vpop.permute.xlu0 %792
        %796 = vset.pattern.permute.xlu0 0
        %797 = vperm.xlu0 %796, %v767
        %v798 = vpop.permute.xlu0 %797
        %v800 = vsub.f32 %v708, %v783
        %v801 = vsub.f32 %v711, %v788
        %v802 = vsub.f32 %v743, %v793
        %v803 = vsub.f32 %v746, %v798
        %v804 = vmul.f32 %v800, 1.442695
        %v805 = vpow.pop %v804
        %v806 = vmul.f32 %v801, 1.442695
        %v807 = vpow.pop %v806
        %v808 = vmul.f32 %v802, 1.442695
        %v809 = vpow.pop %v808
        %v810 = vmul.f32 %v803, 1.442695
        %v811 = vpow.pop %v810
        %v812 = vld [vmem:[#allocation6] sm:$0xff]
        %v813 = vld [vmem:[#allocation6 + $0x8] sm:$0xff]
        %v814 = vld [vmem:[#allocation6 + $0x10] sm:$0xff]
        %v815 = vld [vmem:[#allocation6 + $0x18] sm:$0xff]
        %v816 = vmul.f32 %v773, %v812
        %v817 = vmul.f32 %v775, %v813
        %v818 = vmul.f32 %v777, %v814
        %v819 = vmul.f32 %v779, %v815
        %v820 = vsel %vm570, %v805, 0.0
        %821 = vadd.xlane.f32.xlu0 %v820
        %v822 = vpop.xlane.xlu0 %821
        %v823 = vsel %vm570, %v807, 0.0
        %824 = vadd.xlane.f32.xlu0 %v823
        %v825 = vpop.xlane.xlu0 %824
        %v826 = vsel %vm570, %v809, 0.0
        %827 = vadd.xlane.f32.xlu0 %v826
        %v828 = vpop.xlane.xlu0 %827
        %v829 = vsel %vm570, %v811, 0.0
        %830 = vadd.xlane.f32.xlu0 %v829
        %v831 = vpop.xlane.xlu0 %830
        %v832 = vadd.f32 %v816, %v822
        %v833 = vadd.f32 %v817, %v825
        %v834 = vadd.f32 %v818, %v828
        %v835 = vadd.f32 %v819, %v831
        %vm836 = vcmask 7168
        %837 = vst.msk [vmem:[#allocation6] sm:$0xff] %vm836, %v832
        %838 = vst.msk [vmem:[#allocation6 + $0x8] sm:$0xff] %vm836, %v833
        %839 = vst.msk [vmem:[#allocation6 + $0x10] sm:$0xff] %vm836, %v834
        %840 = vst.msk [vmem:[#allocation6 + $0x18] sm:$0xff] %vm836, %v835
        %v841 = vld [vmem:[#allocation4] sm:$0xff]
        %v842 = vld [vmem:[#allocation4 + $0x8] sm:$0xff]
        %v843 = vld [vmem:[#allocation4 + $0x10] sm:$0xff]
        %v844 = vld [vmem:[#allocation4 + $0x18] sm:$0xff]
        %v846 = vsel %vm570, %v805, 0
        %v849 = vsel %vm570, %v807, 0
        %851 = vmatpush.msra.mxu0 0.0
        %852 = vmatpush.msra.mxu0 0.0
        %853 = vmatpush.msra.mxu0 0.0
        %854 = vmatpush.msra.mxu0 0.0
        %855 = vmatpush.msra.mxu0 0.0
        %856 = vmatpush.msra.mxu0 0.0
        %857 = vmatpush.msra.mxu0 0.0
        %858 = vmatpush.msra.mxu0 0.0
        %859 = vmatpush.msra.mxu0 0.0
        %860 = vmatpush.msra.mxu0 0.0
        %861 = vmatpush.msra.mxu0 0.0
        %862 = vmatpush.msra.mxu0 0.0
        %863 = vmatpush.msra.mxu0 0.0
        %864 = vmatpush.msra.mxu0 0.0
        %865 = vmatpush.msra.mxu0 %v842
        %866 = vmatpush.msra.mxu0 %v841
        %867 = vmatmul.f32.gmra.mxu0 %v846
        %v868 = vpop.f32.mrf.mxu0
        %v869 = vadd.f32 0.0, %v868
        %870 = vmatmul.f32.gmra.mxu0 %v849
        %v871 = vpop.f32.mrf.mxu0
        %v872 = vadd.f32 0.0, %v871
        %873 = vdwg.mxu0
        %v875 = vsel %vm570, %v809, 0
        %v878 = vsel %vm570, %v811, 0
        %880 = vmatpush.msra.mxu0 0.0
        %881 = vmatpush.msra.mxu0 0.0
        %882 = vmatpush.msra.mxu0 0.0
        %883 = vmatpush.msra.mxu0 0.0
        %884 = vmatpush.msra.mxu0 0.0
        %885 = vmatpush.msra.mxu0 0.0
        %886 = vmatpush.msra.mxu0 0.0
        %887 = vmatpush.msra.mxu0 0.0
        %888 = vmatpush.msra.mxu0 0.0
        %889 = vmatpush.msra.mxu0 0.0
        %890 = vmatpush.msra.mxu0 0.0
        %891 = vmatpush.msra.mxu0 0.0
        %892 = vmatpush.msra.mxu0 0.0
        %893 = vmatpush.msra.mxu0 0.0
        %894 = vmatpush.msra.mxu0 %v844
        %895 = vmatpush.msra.mxu0 %v843
        %896 = vmatmul.f32.gmra.mxu0 %v875
        %v897 = vpop.f32.mrf.mxu0
        %v898 = vadd.f32 0.0, %v897
        %899 = vmatmul.f32.gmra.mxu0 %v878
        %v900 = vpop.f32.mrf.mxu0
        %v901 = vadd.f32 0.0, %v900
        %902 = vdwg.mxu0
        %v903 = vld [vmem:[#allocation7] sm:$0xff]
        %v904 = vld [vmem:[#allocation7 + $0x8] sm:$0xff]
        %v905 = vld [vmem:[#allocation7 + $0x10] sm:$0xff]
        %v906 = vld [vmem:[#allocation7 + $0x18] sm:$0xff]
        %908 = vset.pattern.permute.xlu0 0
        %909 = vperm.xlu0 %908, %v773
        %v910 = vpop.permute.xlu0 %909
        %913 = vset.pattern.permute.xlu0 0
        %914 = vperm.xlu0 %913, %v775
        %v915 = vpop.permute.xlu0 %914
        %918 = vset.pattern.permute.xlu0 0
        %919 = vperm.xlu0 %918, %v777
        %v920 = vpop.permute.xlu0 %919
        %923 = vset.pattern.permute.xlu0 0
        %924 = vperm.xlu0 %923, %v779
        %v925 = vpop.permute.xlu0 %924
        %v927 = vmul.f32 %v910, %v903
        %v928 = vmul.f32 %v915, %v904
        %v929 = vmul.f32 %v920, %v905
        %v930 = vmul.f32 %v925, %v906
        %v931 = vadd.f32 %v927, %v869
        %v932 = vadd.f32 %v928, %v872
        %v933 = vadd.f32 %v929, %v898
        %v934 = vadd.f32 %v930, %v901
        %935 = vst.msk [vmem:[#allocation7] sm:$0xff] %vm570, %v931
        %936 = vst.msk [vmem:[#allocation7 + $0x8] sm:$0xff] %vm570, %v932
        %937 = vst.msk [vmem:[#allocation7 + $0x10] sm:$0xff] %vm570, %v933
        %938 = vst.msk [vmem:[#allocation7 + $0x18] sm:$0xff] %vm570, %v934
        %939 = vst.msk [vmem:[#allocation5] sm:$0xff] %vm836, %v764
        %940 = vst.msk [vmem:[#allocation5 + $0x8] sm:$0xff] %vm836, %v765
        %941 = vst.msk [vmem:[#allocation5 + $0x10] sm:$0xff] %vm836, %v766
        %942 = vst.msk [vmem:[#allocation5 + $0x18] sm:$0xff] %vm836, %v767
        %p943 = scmp.eq.s32.totalorder %s30, 1
        // Predicated region
        $region61: #{tpu_custom_call.1} parent=55 // pred_check
          %p944 = pneg %p943
        $region62: #{tpu_custom_call.1} parent=55 // pred_check_branch
          %946 = sbr.rel (%p944) target = $region64
        $region63: #{tpu_custom_call.1} parent=55 // pred_region
          %v947 = vld [vmem:[#allocation6] sm:$0xff]
          %v948 = vld [vmem:[#allocation6 + $0x8] sm:$0xff]
          %v949 = vld [vmem:[#allocation6 + $0x10] sm:$0xff]
          %v950 = vld [vmem:[#allocation6 + $0x18] sm:$0xff]
          %v951 = vrcp.pop %v947
          %v952 = vrcp.pop %v948
          %v953 = vrcp.pop %v949
          %v954 = vrcp.pop %v950
          %v955 = vmul.f32 %v947, %v951
          %v956 = vmul.f32 %v948, %v952
          %v957 = vmul.f32 %v949, %v953
          %v958 = vmul.f32 %v950, %v954
          %v959 = vsub.f32 2.0, %v955
          %v960 = vsub.f32 2.0, %v956
          %v961 = vsub.f32 2.0, %v957
          %v962 = vsub.f32 2.0, %v958
          %v963 = vmul.f32 %v951, %v959
          %v964 = vmul.f32 %v952, %v960
          %v965 = vmul.f32 %v953, %v961
          %v966 = vmul.f32 %v954, %v962
          %v967 = vld [vmem:[#allocation7] sm:$0xff]
          %v968 = vld [vmem:[#allocation7 + $0x8] sm:$0xff]
          %970 = vset.pattern.permute.xlu0 0
          %971 = vperm.xlu0 %970, %v963
          %v972 = vpop.permute.xlu0 %971
          %975 = vset.pattern.permute.xlu0 0
          %976 = vperm.xlu0 %975, %v964
          %v977 = vpop.permute.xlu0 %976
          %v979 = vmul.f32 %v967, %v972
          %v980 = vmul.f32 %v968, %v977
          %v981 = vld [vmem:[%s6] sm:$0xff]
          %v982 = vld [vmem:[%s6 + $0x8] sm:$0xff]
          %s983 = scalar_lea.vmem [#allocation7], 16
          %v984 = vld [vmem:[%s983] sm:$0xff]
          %v985 = vld [vmem:[%s983 + $0x8] sm:$0xff]
          %987 = vset.pattern.permute.xlu0 0
          %988 = vperm.xlu0 %987, %v965
          %v989 = vpop.permute.xlu0 %988
          %992 = vset.pattern.permute.xlu0 0
          %993 = vperm.xlu0 %992, %v966
          %v994 = vpop.permute.xlu0 %993
          %v996 = vmul.f32 %v984, %v989
          %v997 = vmul.f32 %v985, %v994
          %s998 = scalar_lea.vmem %s6, 16
          %v999 = vld [vmem:[%s998] sm:$0xff]
          %v1000 = vld [vmem:[%s998 + $0x8] sm:$0xff]
          %v1002 = vsel %vm570, %v996, 0
          %v1005 = vsel %vm570, %v997, 0
          %1007 = vmatpush.msra.mxu0 0.0
          %1008 = vmatpush.msra.mxu0 0.0
          %1009 = vmatpush.msra.mxu0 0.0
          %1010 = vmatpush.msra.mxu0 0.0
          %1011 = vmatpush.msra.mxu0 0.0
          %1012 = vmatpush.msra.mxu0 0.0
          %1013 = vmatpush.msra.mxu0 0.0
          %1014 = vmatpush.msra.mxu0 0.0
          %1015 = vmatpush.msra.mxu0 0.0
          %1016 = vmatpush.msra.mxu0 0.0
          %1017 = vmatpush.msra.mxu0 0.0
          %1018 = vmatpush.msra.mxu0 0.0
          %1019 = vmatpush.msra.mxu0 0.0
          %1020 = vmatpush.msra.mxu0 0.0
          %1021 = vmatpush.msra.mxu0 %v1000
          %1022 = vmatpush.msra.mxu0 %v999
          %1023 = vmatmul.f32.gmra.mxu0 %v1002
          %v1024 = vpop.f32.mrf.mxu0
          %v1025 = vadd.f32 0.0, %v1024
          %1026 = vmatmul.f32.gmra.mxu0 %v1005
          %v1027 = vpop.f32.mrf.mxu0
          %v1028 = vadd.f32 0.0, %v1027
          %1029 = vdwg.mxu0
          %v1031 = vsel %vm570, %v979, 0
          %v1034 = vsel %vm570, %v980, 0
          %1036 = vmatpush.msra.mxu0 0.0
          %1037 = vmatpush.msra.mxu0 0.0
          %1038 = vmatpush.msra.mxu0 0.0
          %1039 = vmatpush.msra.mxu0 0.0
          %1040 = vmatpush.msra.mxu0 0.0
          %1041 = vmatpush.msra.mxu0 0.0
          %1042 = vmatpush.msra.mxu0 0.0
          %1043 = vmatpush.msra.mxu0 0.0
          %1044 = vmatpush.msra.mxu0 0.0
          %1045 = vmatpush.msra.mxu0 0.0
          %1046 = vmatpush.msra.mxu0 0.0
          %1047 = vmatpush.msra.mxu0 0.0
          %1048 = vmatpush.msra.mxu0 0.0
          %1049 = vmatpush.msra.mxu0 0.0
          %1050 = vmatpush.msra.mxu0 %v982
          %1051 = vmatpush.msra.mxu0 %v981
          %1052 = vmatmul.f32.gmra.mxu0 %v1031
          %v1053 = vpop.f32.mrf.mxu0
          %v1054 = vadd.f32 %v1025, %v1053
          %1055 = vmatmul.f32.gmra.mxu0 %v1034
          %v1056 = vpop.f32.mrf.mxu0
          %v1057 = vadd.f32 %v1028, %v1056
          %1058 = vdwg.mxu0
          %v1059 = vld [vmem:[%s418] sm:$0xff]
          %v1060 = vld [vmem:[%s418 + $0x8] sm:$0xff]
          %v1061 = vadd.f32 %v1054, %v1059
          %v1062 = vadd.f32 %v1057, %v1060
          %v1063 = vsel %vm540, %v1061, 0.0
          %1064 = vadd.xlane.f32.xlu0 %v1063
          %v1065 = vpop.xlane.xlu0 %1064
          %v1066 = vsel %vm540, %v1062, 0.0
          %1067 = vadd.xlane.f32.xlu0 %v1066
          %v1068 = vpop.xlane.xlu0 %1067
          %v1069 = vrcp.pop 32.0
          %v1070 = vmul.f32 32.0, %v1069
          %v1071 = vsub.f32 1.0, %v1070
          %v1072 = vmul.f32 %v1069, %v1071
          %v1073 = vadd.f32 %v1069, %v1072
          %vm1074 = vweird.f32 %v1069
          %v1075 = vsel %vm1074, %v1069, %v1073
          %v1076 = vmul.f32 %v1065, %v1075
          %v1077 = vmul.f32 %v1068, %v1075
          %v1078 = vsub.f32 %v1061, %v1076
          %v1079 = vsub.f32 %v1062, %v1077
          %v1080 = vmul.f32 %v1078, %v1078
          %v1081 = vmul.f32 %v1079, %v1079
          %v1082 = vsel %vm540, %v1080, 0.0
          %1083 = vadd.xlane.f32.xlu0 %v1082
          %v1084 = vpop.xlane.xlu0 %1083
          %v1085 = vsel %vm540, %v1081, 0.0
          %1086 = vadd.xlane.f32.xlu0 %v1085
          %v1087 = vpop.xlane.xlu0 %1086
          %v1088 = vmul.f32 %v1084, %v1075
          %v1089 = vmul.f32 %v1087, %v1075
          %v1090 = vadd.f32 %v1088, 1e-06
          %v1091 = vadd.f32 %v1089, 1e-06
          %v1092 = vrsqrt.pop %v1090
          %v1093 = vmul.f32 %v1092, %v1090
          %v1094 = vmul.f32 %v1093, %v1092
          %v1095 = vmul.f32 0.5, %v1094
          %v1096 = vsub.f32 1.5, %v1095
          %v1097 = vmul.f32 %v1092, %v1096
          %vm1098 = vweird.f32 %v1090
          %vm1099 = vweird.f32 %v1092
          %vm1100 = vmor %vm1098, %vm1099
          %v1101 = vsel %vm1100, %v1092, %v1097
          %v1102 = vrsqrt.pop %v1091
          %v1103 = vmul.f32 %v1102, %v1091
          %v1104 = vmul.f32 %v1103, %v1102
          %v1105 = vmul.f32 0.5, %v1104
          %v1106 = vsub.f32 1.5, %v1105
          %v1107 = vmul.f32 %v1102, %v1106
          %vm1108 = vweird.f32 %v1091
          %vm1109 = vweird.f32 %v1102
          %vm1110 = vmor %vm1108, %vm1109
          %v1111 = vsel %vm1110, %v1102, %v1107
          %v1112 = vmul.f32 %v1078, %v1101
          %v1113 = vmul.f32 %v1079, %v1111
          %v1114 = vld [vmem:[%s7] sm:$0x1]
          %v1116 = vperm.slane %v1114, 0
          %v1118 = vmul.f32 %v1112, %v1116
          %v1119 = vmul.f32 %v1113, %v1116
          %v1120 = vld [vmem:[%s8] sm:$0x1]
          %v1122 = vperm.slane %v1120, 0
          %v1124 = vadd.f32 %v1118, %v1122
          %v1125 = vadd.f32 %v1119, %v1122
          %1126 = vst.msk [vmem:[%s409] sm:$0xff] %vm540, %v1124
          %1127 = vst.msk [vmem:[%s409 + $0x8] sm:$0xff] %vm540, %v1125
        $region64: #{tpu_custom_call.1} parent=55 // pred_fallthru
          _
        %s1128 = sand.u32 %s262, 1
        %s1129 = scalar_lea.sflag [#allocation9], %s1128
        %s1130 = sand.u32 %s262, 1
        %s1131 = smul.addr %s1130, 16
        %s1132 = scalar_lea.vmem [#allocation8], %s1131
        // Predicated region
        $region65: #{tpu_custom_call.1} parent=55 // pred_check
          %p1133 = pneg %p272
        $region66: #{tpu_custom_call.1} parent=55 // pred_check_branch
          %1135 = sbr.rel (%p1133) target = $region68
        $region67: #{tpu_custom_call.1} parent=55 // pred_region
          %s1136 = smul.u32 2, %s29
          %1138 = vsyncadd %s1129, 0
          %s1139 = smul.addr %s28, 4
          %s1140 = sadd.s32 %s1136, %s1139
          %s1141 = smul.addr %s1140, 8
          %s1142 = scalar_lea.hbm %s9, %s1141
          %s1143 = sshll.u32 %s1132, 4
          %s1144 = int_to_ptr.vmem [resolvable:$true] %s1143
          %s1145 = sshll.u32 %s1142, 4
          %s1146 = int_to_ptr.hbm [resolvable:$true] %s1145
          %1151 = dma.vmem_to_hbm [thread:$0]  %s1144, 256, %s1146, %s1129, 128, 128, 8
        $region68: #{tpu_custom_call.1} parent=55 // pred_fallthru
          _
      $region56: #{tpu_custom_call.1} parent=5 // pred_fallthru
        _
      %p1152 = scmp.le.s32.totalorder 2, %s18
      // Predicated region
      $region69: #{tpu_custom_call.1} parent=5 // pred_check
        %p1153 = pneg %p1152
      $region70: #{tpu_custom_call.1} parent=5 // pred_check_branch
        %1155 = sbr.rel (%p1153) target = $region72
      $region71: #{tpu_custom_call.1} parent=5 // pred_region
        %s1156 = ssub.s32 %s18, 2
        // Predicated region
        $region73: #{tpu_custom_call.1} parent=71 // pred_check
          %p1157 = pneg %p278
        $region74: #{tpu_custom_call.1} parent=71 // pred_check_branch
          %1159 = sbr.rel (%p1157) target = $region76
        $region75: #{tpu_custom_call.1} parent=71 // pred_region
          %s1160 = sand.u32 %s263, 1
          %s1161 = scalar_lea.sflag [#allocation9], %s1160
          %s1162 = sand.u32 %s263, 1
          %s1163 = smul.addr %s1162, 16
          %s1164 = scalar_lea.vmem [#allocation8], %s1163
          %1166 = dma.done %s1161, 256
        $region76: #{tpu_custom_call.1} parent=71 // pred_fallthru
          _
      $region72: #{tpu_custom_call.1} parent=5 // pred_fallthru
        _
    $region6: #{tpu_custom_call.1} parent=1 // loop_footer
      %s22 = sadd.s32 1, %s18
    $region7: #{tpu_custom_call.1} parent=1 // loop_footer_branch
      %17 = sbr.rel target = $region3
    $region8: #{tpu_custom_call.1} parent=1 // loop_exit
      _
    %1167 = vsyncpa [#allocation9], 1
    %s1168 = scalar_lea.sflag [#allocation9], 1
    %1169 = vsyncpa %s1168, 1

</llo_original>
